<compile_context>
chip_gen: v6e
topology: v6e:2x2x1
jax: 0.10.0
libtpu: 0.0.40
codegen_flags: <defaults>
</compile_context>

<pallas_src>
import functools

import jax
import jax.numpy as jnp
from jax.experimental import pallas as pl
from jax.experimental.pallas import tpu as pltpu


def _round_up(x, m):
    return (x + m - 1) // m * m


def _conv_stats_kernel(x_ref, w_ref, mask_ref, y_ref, stats_ref, *,
                       k, pitch, tile_m, stride, tile_in_rows):
    # x_ref:     (1, FLAT_PAD, K*Cin)  bf16  padded image, kw taps pre-folded
    #                                        into channels, row pitch `pitch`.
    # w_ref:     (K, K*Cin, Cout_p)    bf16  weights grouped by kh.
    # mask_ref:  (tile_m, 1)           f32   1.0 on valid output columns.
    # y_ref:     (1, tile_m, Cout_p)   bf16  conv output tile (row-flattened).
    # stats_ref: (1, 1, 2, Cout_p)     f32   per-tile [sum, sum_of_squares].
    t = pl.program_id(1)
    base = pl.multiple_of(t * tile_in_rows, 8)   # tile_in_rows % 8 == 0

    def tap(kh):
        start = base + kh * pitch                # multiple of 8 -> aligned read
        if stride == 1:
            return x_ref[0, pl.ds(start, tile_m), :]
        # stride > 1: strided sublane read of every `stride`-th flat row.
        return x_ref[0, pl.ds(start, tile_m, stride=stride), :]

    # Local f32 accumulator: no per-tap VMEM read-modify-write of the output,
    # one store at the end.  Each dot contracts over K*Cin (kw folded in).
    acc = jnp.dot(tap(0), w_ref[0], preferred_element_type=jnp.float32)
    for kh in range(1, k):
        acc = acc + jnp.dot(tap(kh), w_ref[kh],
                            preferred_element_type=jnp.float32)

    # Single-pass BN moments over valid output columns, from the f32
    # accumulator (before the bf16 downcast).  Wrap-around "junk" columns of
    # the row-flattened layout are masked out.
    yv = acc * mask_ref[...]
    stats_ref[0, 0, 0:1, :] = jnp.sum(yv, axis=0, keepdims=True)
    stats_ref[0, 0, 1:2, :] = jnp.sum(yv * yv, axis=0, keepdims=True)

    # Single bf16 store of the conv tile (halves HBM writeback vs f32).
    y_ref[0] = acc.astype(y_ref.dtype)


def _pick_tile_oh(oh, pitch, cout_p, budget_bytes=2 * 1024 * 1024):
    """Largest divisor of `oh` whose f32 accumulator tile fits `budget_bytes`
    and keeps the bf16 output tile 16-sublane aligned (unless it is the whole
    row axis).  The accumulator is a local value now, so the budget is kept
    moderate: big enough to amortize per-grid-step overhead, small enough to
    bound register spill traffic."""
    valid = [c for c in range(1, oh + 1)
             if oh % c == 0 and (c == oh or (c * pitch) % 16 == 0)]
    fitting = [c for c in valid if c * pitch * cout_p * 4 <= budget_bytes]
    return max(fitting) if fitting else min(valid)


@functools.partial(jax.jit, static_argnames=("kernel", "stride", "tile_oh"))
def conv_block_forward(x_nchw, conv_weight, bn_gamma, bn_beta, *,
                       kernel, stride, tile_oh=None):
    """x_nchw: (N, Cin, H, W); conv_weight: (Cout, Cin, K, K) (PyTorch layout)."""
    n, cin, h, w = x_nchw.shape
    cout = conv_weight.shape[0]
    k, s, pad = kernel, stride, 1
    oh = (h + 2 * pad - k) // s + 1
    ow = (w + 2 * pad - k) // s + 1
    hp, wp = h + 2 * pad, w + 2 * pad
    cout_p = _round_up(cout, 128)     # lane-dense stores / MXU-friendly N dim
    pitch = _round_up(wp, 8)          # 8-aligned flattened row pitch
    kcin = k * cin

    if tile_oh is None:
        tile_oh = _pick_tile_oh(oh, pitch, cout_p)
    assert oh % tile_oh == 0
    rt = oh // tile_oh                # row tiles per image
    tile_m = tile_oh * pitch          # rows of one flattened output tile
    tile_in_rows = tile_oh * s * pitch

    # --- glue (wrapper-side layout, fused by XLA) --------------------------
    # NCHW -> padded NHWC; fold the K horizontal (kw) taps into the channel
    # axis so the kernel only needs K row-shifted (8-aligned) reads and K
    # matmuls with a K*Cin-deep contraction.
    x_nhwc = jnp.transpose(x_nchw, (0, 2, 3, 1))
    xp = jnp.pad(x_nhwc, ((0, 0), (pad, pad), (pad, pad), (0, 0)))
    xpe = jnp.pad(xp, ((0, 0), (0, 0), (0, pitch + k - 1 - wp), (0, 0)))
    xk = jnp.concatenate([xpe[:, :, kw:kw + pitch, :] for kw in range(k)],
                         axis=-1)                       # (N, HP, pitch, K*Cin)
    x_flat = xk.reshape(n, hp * pitch, kcin).astype(jnp.bfloat16)
    # Pad the flat row axis so the deepest shifted/strided read stays in bounds.
    need = (rt - 1) * tile_in_rows + (k - 1) * pitch + (tile_m - 1) * s + 1
    flat_pad = _round_up(max(need, hp * pitch), 8)
    x_flat = jnp.pad(x_flat, ((0, 0), (0, flat_pad - hp * pitch), (0, 0)))

    # Weights (Cout, Cin, K, K) -> (K, K*Cin, Cout_p); rows within each kh are
    # ordered (kw, cin) to match the channel interleave above.
    w_t = jnp.transpose(conv_weight, (2, 3, 1, 0)).reshape(k, kcin, cout)
    w_t = jnp.pad(w_t, ((0, 0), (0, 0), (0, cout_p - cout))).astype(jnp.bfloat16)

    # Valid-column mask (pattern repeats every `pitch` flat rows).
    mask = jnp.tile((jnp.arange(pitch) < ow).astype(jnp.float32), tile_oh)
    mask = mask.reshape(tile_m, 1)

    kern = functools.partial(_conv_stats_kernel, k=k, pitch=pitch,
                             tile_m=tile_m, stride=s, tile_in_rows=tile_in_rows)
    y, stats = pl.pallas_call(
        kern,
        grid=(n, rt),
        in_specs=[
            pl.BlockSpec((1, flat_pad, kcin), lambda i, t: (i, 0, 0)),
            pl.BlockSpec((k, kcin, cout_p), lambda i, t: (0, 0, 0)),
            pl.BlockSpec((tile_m, 1), lambda i, t: (0, 0)),
        ],
        out_specs=[
            pl.BlockSpec((1, tile_m, cout_p), lambda i, t: (i, t, 0)),
            pl.BlockSpec((1, 1, 2, cout_p), lambda i, t: (i, t, 0, 0)),
        ],
        out_shape=[
            jax.ShapeDtypeStruct((n, oh * pitch, cout_p), jnp.bfloat16),
            jax.ShapeDtypeStruct((n, rt, 2, cout_p), jnp.float32),
        ],
        compiler_params=pltpu.CompilerParams(
            dimension_semantics=("parallel", "parallel"),
            vmem_limit_bytes=64 * 1024 * 1024),
        cost_estimate=pl.CostEstimate(
            flops=2 * n * oh * pitch * k * kcin * cout_p,
            transcendentals=0,
            bytes_accessed=(x_flat.size * 2 + w_t.size * 2
                            + n * oh * pitch * cout_p * 2
                            + n * rt * 2 * cout_p * 4)),
    )(x_flat, w_t, mask)

    # --- BatchNorm finalize (training-mode batch stats) + apply ------------
    # Tiny per-channel math plus the trivial y*scale+shift stay in plain jnp so
    # XLA fuses them into the crop / transpose-to-NCHW epilogue (no second
    # Pallas pass, no extra HBM activation round trip).
    moments = jnp.sum(stats, axis=(0, 1))                      # (2, Cout_p)
    count = jnp.float32(n * oh * ow)
    mean = moments[0, :cout] / count
    # Single-pass variance; clamp guards the E[x^2]-E[x]^2 cancellation.
    var = jnp.maximum(moments[1, :cout] / count - mean * mean, 0.0)
    inv_std = jax.lax.rsqrt(var + jnp.float32(1e-5))
    scale = bn_gamma.astype(jnp.float32) * inv_std
    shift = bn_beta.astype(jnp.float32) - mean * scale

    out = y.reshape(n, oh, pitch, cout_p)[:, :, :ow, :cout].astype(jnp.float32)
    out = out * scale.reshape(1, 1, 1, cout) + shift.reshape(1, 1, 1, cout)
    # TODO(synk): BatchNorm2d running_mean/running_var buffer updates (a
    # training-time side effect) are not produced; only the forward output is.
    return jnp.transpose(out, (0, 3, 1, 2)).astype(x_nchw.dtype)


def _reference(x_nchw, conv_weight, bn_gamma, bn_beta, kernel, stride):
    y = jax.lax.conv_general_dilated(
        x_nchw.astype(jnp.float32), conv_weight.astype(jnp.float32),
        window_strides=(stride, stride), padding=((1, 1), (1, 1)),
        dimension_numbers=("NCHW", "OIHW", "NCHW"))
    mean = jnp.mean(y, axis=(0, 2, 3), keepdims=True)
    var = jnp.mean((y - mean) ** 2, axis=(0, 2, 3), keepdims=True)
    xhat = (y - mean) * jax.lax.rsqrt(var + 1e-5)
    return xhat * bn_gamma.reshape(1, -1, 1, 1) + bn_beta.reshape(1, -1, 1, 1)


if __name__ == "__main__":
    # Shapes consistent with ConvBlock(input_dim=4, output_dim=8, kernel=3, stride=1)
    N, CIN, H, W = 2, 4, 16, 16
    COUT, K, S = 8, 3, 1

    key = jax.random.PRNGKey(0)
    k_x, k_w, k_g, k_b = jax.random.split(key, 4)
    x = jax.random.normal(k_x, (N, CIN, H, W), dtype=jnp.float32)
    fan_in = CIN * K * K
    bound = 1.0 / (fan_in ** 0.5)
    conv_w = jax.random.uniform(k_w, (COUT, CIN, K, K), jnp.float32, -bound, bound)
    gamma = jax.random.uniform(k_g, (COUT,), jnp.float32, 0.5, 1.5)
    beta = jax.random.uniform(k_b, (COUT,), jnp.float32, -0.5, 0.5)

    # tile_oh=8 -> 2 row tiles per image: exercises the (batch, row-tile) grid.
    out = conv_block_forward(x, conv_w, gamma, beta, kernel=K, stride=S, tile_oh=8)
    out = jax.block_until_ready(out)

    ref = _reference(x, conv_w, gamma, beta, K, S)
    assert out.shape == (N, COUT, H, W)
    max_err = float(jnp.max(jnp.abs(out - ref)))
    # bf16 MXU operands + bf16 conv intermediate with f32 accumulation/stats:
    # tolerance covers operand and intermediate quantization.
    assert jnp.allclose(out, ref, rtol=2e-2, atol=3e-2), (
        f"mismatch vs reference (max abs err {max_err})")

    print("KERNEL_OK")
</pallas_src>

<mosaic_0001>
module attributes {stable_mosaic.version = 11 : i64} {
  func.func @_conv_stats_kernel(%arg0: i32, %arg1: i32, %arg2: memref<1x432x12xbf16, #tpu.memory_space<vmem>>, %arg3: memref<3x12x128xbf16, #tpu.memory_space<vmem>>, %arg4: memref<192x1xf32, #tpu.memory_space<vmem>>, %arg5: memref<1x192x128xbf16, #tpu.memory_space<vmem>>, %arg6: memref<1x1x2x128xf32, #tpu.memory_space<vmem>>) attributes {dimension_semantics = [#tpu.dimension_semantics<parallel>, #tpu.dimension_semantics<parallel>], iteration_bounds = array<i64: 2, 2>, scalar_prefetch = 0 : i64, scratch_operands = 0 : i64, tpu.core_type = #tpu.core_type<tc>, window_params = [{transform_indices = @transform_0, window_bounds = array<i64: 1, 432, 12>}, {pipeline_mode = #tpu.pipeline_mode<synchronous>, transform_indices = @transform_1, window_bounds = array<i64: 3, 12, 128>}, {pipeline_mode = #tpu.pipeline_mode<synchronous>, transform_indices = @transform_2, window_bounds = array<i64: 192, 1>}, {transform_indices = @transform_3, window_bounds = array<i64: 1, 192, 128>}, {transform_indices = @transform_4, window_bounds = array<i64: 1, 1, 2, 128>}]} {
    %c192_i32 = arith.constant 192 : i32
    %0 = arith.muli %arg1, %c192_i32 : i32
    %1 = tpu.assume_multiple %0, 8 : i32
    %c0_i32 = arith.constant 0 : i32
    %2 = arith.addi %1, %c0_i32 : i32
    %c0 = arith.constant 0 : index
    %3 = arith.index_cast %2 : i32 to index
    %c0_0 = arith.constant 0 : index
    %4 = vector.load %arg2[%c0, %3, %c0_0] : memref<1x432x12xbf16, #tpu.memory_space<vmem>>, vector<1x192x12xbf16>
    %5 = vector.shape_cast %4 : vector<1x192x12xbf16> to vector<192x12xbf16>
    %c0_1 = arith.constant 0 : index
    %c0_2 = arith.constant 0 : index
    %c0_3 = arith.constant 0 : index
    %6 = vector.load %arg3[%c0_1, %c0_2, %c0_3] : memref<3x12x128xbf16, #tpu.memory_space<vmem>>, vector<1x12x128xbf16>
    %7 = vector.shape_cast %6 : vector<1x12x128xbf16> to vector<12x128xbf16>
    %cst = arith.constant dense<0.000000e+00> : vector<192x128xf32>
    %8 = tpu.matmul %5, %7, %cst {dimension_numbers = #tpu.dot_dimension_numbers<[1], [0], [0], [1], [0, 0, 1, 1], [], []>} : vector<192x12xbf16>, vector<12x128xbf16>, vector<192x128xf32> -> vector<192x128xf32>
    %c24_i32 = arith.constant 24 : i32
    %9 = arith.addi %1, %c24_i32 : i32
    %c0_4 = arith.constant 0 : index
    %10 = arith.index_cast %9 : i32 to index
    %c0_5 = arith.constant 0 : index
    %11 = vector.load %arg2[%c0_4, %10, %c0_5] : memref<1x432x12xbf16, #tpu.memory_space<vmem>>, vector<1x192x12xbf16>
    %12 = vector.shape_cast %11 : vector<1x192x12xbf16> to vector<192x12xbf16>
    %c1 = arith.constant 1 : index
    %c0_6 = arith.constant 0 : index
    %c0_7 = arith.constant 0 : index
    %13 = vector.load %arg3[%c1, %c0_6, %c0_7] : memref<3x12x128xbf16, #tpu.memory_space<vmem>>, vector<1x12x128xbf16>
    %14 = vector.shape_cast %13 : vector<1x12x128xbf16> to vector<12x128xbf16>
    %cst_8 = arith.constant dense<0.000000e+00> : vector<192x128xf32>
    %15 = tpu.matmul %12, %14, %cst_8 {dimension_numbers = #tpu.dot_dimension_numbers<[1], [0], [0], [1], [0, 0, 1, 1], [], []>} : vector<192x12xbf16>, vector<12x128xbf16>, vector<192x128xf32> -> vector<192x128xf32>
    %16 = arith.addf %8, %15 : vector<192x128xf32>
    %c48_i32 = arith.constant 48 : i32
    %17 = arith.addi %1, %c48_i32 : i32
    %c0_9 = arith.constant 0 : index
    %18 = arith.index_cast %17 : i32 to index
    %c0_10 = arith.constant 0 : index
    %19 = vector.load %arg2[%c0_9, %18, %c0_10] : memref<1x432x12xbf16, #tpu.memory_space<vmem>>, vector<1x192x12xbf16>
    %20 = vector.shape_cast %19 : vector<1x192x12xbf16> to vector<192x12xbf16>
    %c2 = arith.constant 2 : index
    %c0_11 = arith.constant 0 : index
    %c0_12 = arith.constant 0 : index
    %21 = vector.load %arg3[%c2, %c0_11, %c0_12] : memref<3x12x128xbf16, #tpu.memory_space<vmem>>, vector<1x12x128xbf16>
    %22 = vector.shape_cast %21 : vector<1x12x128xbf16> to vector<12x128xbf16>
    %cst_13 = arith.constant dense<0.000000e+00> : vector<192x128xf32>
    %23 = tpu.matmul %20, %22, %cst_13 {dimension_numbers = #tpu.dot_dimension_numbers<[1], [0], [0], [1], [0, 0, 1, 1], [], []>} : vector<192x12xbf16>, vector<12x128xbf16>, vector<192x128xf32> -> vector<192x128xf32>
    %24 = arith.addf %16, %23 : vector<192x128xf32>
    %c0_14 = arith.constant 0 : index
    %c0_15 = arith.constant 0 : index
    %25 = vector.load %arg4[%c0_14, %c0_15] : memref<192x1xf32, #tpu.memory_space<vmem>>, vector<192x1xf32>
    %26 = vector.broadcast %25 : vector<192x1xf32> to vector<192x128xf32>
    %27 = arith.mulf %24, %26 : vector<192x128xf32>
    %cst_16 = arith.constant dense<0.000000e+00> : vector<128xf32>
    %28 = vector.multi_reduction <add>, %27, %cst_16 [0] : vector<192x128xf32> to vector<128xf32>
    %29 = vector.shape_cast %28 : vector<128xf32> to vector<1x128xf32>
    %c0_17 = arith.constant 0 : index
    %c0_18 = arith.constant 0 : index
    %c0_19 = arith.constant 0 : index
    %c0_20 = arith.constant 0 : index
    %30 = vector.load %arg6[%c0_17, %c0_18, %c0_19, %c0_20] : memref<1x1x2x128xf32, #tpu.memory_space<vmem>>, vector<1x1x1x128xf32>
    %31 = vector.shape_cast %30 : vector<1x1x1x128xf32> to vector<1x128xf32>
    %32 = vector.shape_cast %29 : vector<1x128xf32> to vector<1x1x1x128xf32>
    tpu.vector_store %arg6[%c0_17, %c0_18, %c0_19, %c0_20], %32 {strides = array<i32>} : memref<1x1x2x128xf32, #tpu.memory_space<vmem>>, vector<1x1x1x128xf32>,
    %33 = arith.mulf %27, %27 : vector<192x128xf32>
    %cst_21 = arith.constant dense<0.000000e+00> : vector<128xf32>
    %34 = vector.multi_reduction <add>, %33, %cst_21 [0] : vector<192x128xf32> to vector<128xf32>
    %35 = vector.shape_cast %34 : vector<128xf32> to vector<1x128xf32>
    %c0_22 = arith.constant 0 : index
    %c0_23 = arith.constant 0 : index
    %c1_24 = arith.constant 1 : index
    %c0_25 = arith.constant 0 : index
    %36 = vector.load %arg6[%c0_22, %c0_23, %c1_24, %c0_25] : memref<1x1x2x128xf32, #tpu.memory_space<vmem>>, vector<1x1x1x128xf32>
    %37 = vector.shape_cast %36 : vector<1x1x1x128xf32> to vector<1x128xf32>
    %38 = vector.shape_cast %35 : vector<1x128xf32> to vector<1x1x1x128xf32>
    tpu.vector_store %arg6[%c0_22, %c0_23, %c1_24, %c0_25], %38 {strides = array<i32>} : memref<1x1x2x128xf32, #tpu.memory_space<vmem>>, vector<1x1x1x128xf32>,
    %39 = arith.truncf %24 : vector<192x128xf32> to vector<192x128xbf16>
    %c0_26 = arith.constant 0 : index
    %c0_27 = arith.constant 0 : index
    %c0_28 = arith.constant 0 : index
    %40 = vector.load %arg5[%c0_26, %c0_27, %c0_28] : memref<1x192x128xbf16, #tpu.memory_space<vmem>>, vector<1x192x128xbf16>
    %41 = vector.shape_cast %40 : vector<1x192x128xbf16> to vector<192x128xbf16>
    %42 = vector.shape_cast %39 : vector<192x128xbf16> to vector<1x192x128xbf16>
    tpu.vector_store %arg5[%c0_26, %c0_27, %c0_28], %42 {strides = array<i32>} : memref<1x192x128xbf16, #tpu.memory_space<vmem>>, vector<1x192x128xbf16>,
    return
  }
  func.func @transform_0(%arg0: i32, %arg1: i32) -> (i32, i32, i32) {
    %c0_i32 = arith.constant 0 : i32
    %c0_i32_0 = arith.constant 0 : i32
    %c0_i32_1 = arith.constant 0 : i32
    return %arg0, %c0_i32, %c0_i32_0 : i32, i32, i32
  }
  func.func @transform_1(%arg0: i32, %arg1: i32) -> (i32, i32, i32) {
    %c0_i32 = arith.constant 0 : i32
    %c0_i32_0 = arith.constant 0 : i32
    %c0_i32_1 = arith.constant 0 : i32
    %c0_i32_2 = arith.constant 0 : i32
    return %c0_i32, %c0_i32_0, %c0_i32_1 : i32, i32, i32
  }
  func.func @transform_2(%arg0: i32, %arg1: i32) -> (i32, i32) {
    %c0_i32 = arith.constant 0 : i32
    %c0_i32_0 = arith.constant 0 : i32
    %c0_i32_1 = arith.constant 0 : i32
    return %c0_i32, %c0_i32_0 : i32, i32
  }
  func.func @transform_3(%arg0: i32, %arg1: i32) -> (i32, i32, i32) {
    %c0_i32 = arith.constant 0 : i32
    %c0_i32_0 = arith.constant 0 : i32
    return %arg0, %arg1, %c0_i32 : i32, i32, i32
  }
  func.func @transform_4(%arg0: i32, %arg1: i32) -> (i32, i32, i32, i32) {
    %c0_i32 = arith.constant 0 : i32
    %c0_i32_0 = arith.constant 0 : i32
    %c0_i32_1 = arith.constant 0 : i32
    return %arg0, %arg1, %c0_i32, %c0_i32_0 : i32, i32, i32, i32
  }
}

</mosaic_0001>

<llo_original>
// kernel: tile.8
$region0: #{tile.8}
  #allocation0 [shape = 's32[1]{0}', space=sflag, size = 0x4, scoped, tag = 'scoped memory for tile.8']
  %s0 = inlined_call_operand.vmem [shape: f32[24], index: 0, kind: input, shape index: {}]
  %s1 = inlined_call_operand.vmem [shape: f32[8,24], index: 1, kind: output, shape index: {}]
  // Predicated region
  $region2: #{tile.8} parent=0 // pred_check
    _
  $region3: #{tile.8} parent=0 // pred_check_branch
    %3 = sbr.rel (0) target = $region5
  $region4: #{tile.8} parent=0 // pred_region
    _
  $region5: #{tile.8} parent=0 // pred_fallthru
    _
  %v4 = vld [vmem:[%s0] ss:$0 sm:$0xff]
  %5 = vst [vmem:[%s1] sm:$0xff] %v4

// kernel: tile.0
$region0: #{tile.0}
  %s0 = inlined_call_operand.vmem [shape: f32[8,24], index: 0, kind: input, shape index: {}]
  %s1 = inlined_call_operand.vmem [shape: f32[192,1], index: 1, kind: output, shape index: {}]
  %v2 = vld [vmem:[%s0] sm:$0xff]
  %vm3 = vcmask 7168
  %4 = vst.msk [vmem:[%s1] ss:$24 sm:$0xf] %vm3, %v2
  %5 = vst.msk [vmem:[%s1] ss:$24 sm:$0xf0] %vm3, %v2
  %v6 = vld.sshfl [vmem:[%s0] sm:$0xff pattern:$0x56741230]
  %7 = vrot.lane.b32.xlu0 %v6, 127
  %v8 = vpop.permute.xlu0 %7
  %vm9 = vcmask 7168
  %s10 = scalar_lea.vmem %s1, 1
  %11 = vst.msk [vmem:[%s10] ss:$72 sm:$0x3] %vm9, %v8
  %s12 = scalar_lea.vmem %s1, 97
  %13 = vst.msk [vmem:[%s12] ss:$-24 sm:$0xc] %vm9, %v8
  %s14 = scalar_lea.vmem %s1, 4294967105
  %15 = vst.msk [vmem:[%s14] ss:$72 sm:$0x30] %vm9, %v8
  %s16 = scalar_lea.vmem %s1, 289
  %17 = vst.msk [vmem:[%s16] ss:$-24 sm:$0xc0] %vm9, %v8
  %v18 = vld.sshfl [vmem:[%s0] sm:$0xff pattern:$0x56741230]
  %19 = vrot.lane.b32.xlu0 %v18, 126
  %v20 = vpop.permute.xlu0 %19
  %vm21 = vcmask 7168
  %s22 = scalar_lea.vmem %s1, 2
  %23 = vst.msk [vmem:[%s22] ss:$72 sm:$0x3] %vm21, %v20
  %s24 = scalar_lea.vmem %s1, 98
  %25 = vst.msk [vmem:[%s24] ss:$-24 sm:$0xc] %vm21, %v20
  %s26 = scalar_lea.vmem %s1, 4294967106
  %27 = vst.msk [vmem:[%s26] ss:$72 sm:$0x30] %vm21, %v20
  %s28 = scalar_lea.vmem %s1, 290
  %29 = vst.msk [vmem:[%s28] ss:$-24 sm:$0xc0] %vm21, %v20
  %v30 = vld.sshfl [vmem:[%s0] sm:$0xff pattern:$0x56741230]
  %31 = vrot.lane.b32.xlu0 %v30, 125
  %v32 = vpop.permute.xlu0 %31
  %vm33 = vcmask 7168
  %s34 = scalar_lea.vmem %s1, 3
  %35 = vst.msk [vmem:[%s34] ss:$72 sm:$0x3] %vm33, %v32
  %s36 = scalar_lea.vmem %s1, 99
  %37 = vst.msk [vmem:[%s36] ss:$-24 sm:$0xc] %vm33, %v32
  %s38 = scalar_lea.vmem %s1, 4294967107
  %39 = vst.msk [vmem:[%s38] ss:$72 sm:$0x30] %vm33, %v32
  %s40 = scalar_lea.vmem %s1, 291
  %41 = vst.msk [vmem:[%s40] ss:$-24 sm:$0xc0] %vm33, %v32
  %v42 = vld.sshfl [vmem:[%s0] sm:$0xff pattern:$0x56741230]
  %43 = vrot.lane.b32.xlu0 %v42, 124
  %v44 = vpop.permute.xlu0 %43
  %vm45 = vcmask 7168
  %s46 = scalar_lea.vmem %s1, 4
  %47 = vst.msk [vmem:[%s46] ss:$72 sm:$0x3] %vm45, %v44
  %s48 = scalar_lea.vmem %s1, 100
  %49 = vst.msk [vmem:[%s48] ss:$-24 sm:$0xc] %vm45, %v44
  %s50 = scalar_lea.vmem %s1, 4294967108
  %51 = vst.msk [vmem:[%s50] ss:$72 sm:$0x30] %vm45, %v44
  %s52 = scalar_lea.vmem %s1, 292
  %53 = vst.msk [vmem:[%s52] ss:$-24 sm:$0xc0] %vm45, %v44
  %v54 = vld.sshfl [vmem:[%s0] sm:$0xff pattern:$0x56741230]
  %55 = vrot.lane.b32.xlu0 %v54, 123
  %v56 = vpop.permute.xlu0 %55
  %vm57 = vcmask 7168
  %s58 = scalar_lea.vmem %s1, 5
  %59 = vst.msk [vmem:[%s58] ss:$72 sm:$0x3] %vm57, %v56
  %s60 = scalar_lea.vmem %s1, 101
  %61 = vst.msk [vmem:[%s60] ss:$-24 sm:$0xc] %vm57, %v56
  %s62 = scalar_lea.vmem %s1, 4294967109
  %63 = vst.msk [vmem:[%s62] ss:$72 sm:$0x30] %vm57, %v56
  %s64 = scalar_lea.vmem %s1, 293
  %65 = vst.msk [vmem:[%s64] ss:$-24 sm:$0xc0] %vm57, %v56
  %v66 = vld.sshfl [vmem:[%s0] sm:$0xff pattern:$0x56741230]
  %67 = vrot.lane.b32.xlu0 %v66, 122
  %v68 = vpop.permute.xlu0 %67
  %vm69 = vcmask 7168
  %s70 = scalar_lea.vmem %s1, 6
  %71 = vst.msk [vmem:[%s70] ss:$72 sm:$0x3] %vm69, %v68
  %s72 = scalar_lea.vmem %s1, 102
  %73 = vst.msk [vmem:[%s72] ss:$-24 sm:$0xc] %vm69, %v68
  %s74 = scalar_lea.vmem %s1, 4294967110
  %75 = vst.msk [vmem:[%s74] ss:$72 sm:$0x30] %vm69, %v68
  %s76 = scalar_lea.vmem %s1, 294
  %77 = vst.msk [vmem:[%s76] ss:$-24 sm:$0xc0] %vm69, %v68
  %v78 = vld.sshfl [vmem:[%s0] sm:$0xff pattern:$0x56741230]
  %79 = vrot.lane.b32.xlu0 %v78, 121
  %v80 = vpop.permute.xlu0 %79
  %vm81 = vcmask 7168
  %s82 = scalar_lea.vmem %s1, 7
  %83 = vst.msk [vmem:[%s82] ss:$72 sm:$0x3] %vm81, %v80
  %s84 = scalar_lea.vmem %s1, 103
  %85 = vst.msk [vmem:[%s84] ss:$-24 sm:$0xc] %vm81, %v80
  %s86 = scalar_lea.vmem %s1, 4294967111
  %87 = vst.msk [vmem:[%s86] ss:$72 sm:$0x30] %vm81, %v80
  %s88 = scalar_lea.vmem %s1, 295
  %89 = vst.msk [vmem:[%s88] ss:$-24 sm:$0xc0] %vm81, %v80
  %v90 = vld.sshfl [vmem:[%s0] sm:$0xff pattern:$0x67452301]
  %91 = vrot.lane.b32.xlu0 %v90, 120
  %v92 = vpop.permute.xlu0 %91
  %vm93 = vcmask 7168
  %s94 = scalar_lea.vmem %s1, 32
  %95 = vst.msk [vmem:[%s94] ss:$-24 sm:$0x3] %vm93, %v92
  %s96 = scalar_lea.vmem %s1, 128
  %97 = vst.msk [vmem:[%s96] ss:$-24 sm:$0xc] %vm93, %v92
  %s98 = scalar_lea.vmem %s1, 224
  %99 = vst.msk [vmem:[%s98] ss:$-24 sm:$0x30] %vm93, %v92
  %s100 = scalar_lea.vmem %s1, 320
  %101 = vst.msk [vmem:[%s100] ss:$-24 sm:$0xc0] %vm93, %v92
  %v102 = vld.sshfl [vmem:[%s0] sm:$0xff pattern:$0x67452301]
  %103 = vrot.lane.b32.xlu0 %v102, 119
  %v104 = vpop.permute.xlu0 %103
  %vm105 = vcmask 7168
  %s106 = scalar_lea.vmem %s1, 33
  %107 = vst.msk [vmem:[%s106] ss:$-24 sm:$0x3] %vm105, %v104
  %s108 = scalar_lea.vmem %s1, 129
  %109 = vst.msk [vmem:[%s108] ss:$-24 sm:$0xc] %vm105, %v104
  %s110 = scalar_lea.vmem %s1, 225
  %111 = vst.msk [vmem:[%s110] ss:$-24 sm:$0x30] %vm105, %v104
  %s112 = scalar_lea.vmem %s1, 321
  %113 = vst.msk [vmem:[%s112] ss:$-24 sm:$0xc0] %vm105, %v104
  %v114 = vld.sshfl [vmem:[%s0] sm:$0xff pattern:$0x67452301]
  %115 = vrot.lane.b32.xlu0 %v114, 118
  %v116 = vpop.permute.xlu0 %115
  %vm117 = vcmask 7168
  %s118 = scalar_lea.vmem %s1, 34
  %119 = vst.msk [vmem:[%s118] ss:$-24 sm:$0x3] %vm117, %v116
  %s120 = scalar_lea.vmem %s1, 130
  %121 = vst.msk [vmem:[%s120] ss:$-24 sm:$0xc] %vm117, %v116
  %s122 = scalar_lea.vmem %s1, 226
  %123 = vst.msk [vmem:[%s122] ss:$-24 sm:$0x30] %vm117, %v116
  %s124 = scalar_lea.vmem %s1, 322
  %125 = vst.msk [vmem:[%s124] ss:$-24 sm:$0xc0] %vm117, %v116
  %v126 = vld.sshfl [vmem:[%s0] sm:$0xff pattern:$0x67452301]
  %127 = vrot.lane.b32.xlu0 %v126, 117
  %v128 = vpop.permute.xlu0 %127
  %vm129 = vcmask 7168
  %s130 = scalar_lea.vmem %s1, 35
  %131 = vst.msk [vmem:[%s130] ss:$-24 sm:$0x3] %vm129, %v128
  %s132 = scalar_lea.vmem %s1, 131
  %133 = vst.msk [vmem:[%s132] ss:$-24 sm:$0xc] %vm129, %v128
  %s134 = scalar_lea.vmem %s1, 227
  %135 = vst.msk [vmem:[%s134] ss:$-24 sm:$0x30] %vm129, %v128
  %s136 = scalar_lea.vmem %s1, 323
  %137 = vst.msk [vmem:[%s136] ss:$-24 sm:$0xc0] %vm129, %v128
  %v138 = vld.sshfl [vmem:[%s0] sm:$0xff pattern:$0x67452301]
  %139 = vrot.lane.b32.xlu0 %v138, 116
  %v140 = vpop.permute.xlu0 %139
  %vm141 = vcmask 7168
  %s142 = scalar_lea.vmem %s1, 36
  %143 = vst.msk [vmem:[%s142] ss:$-24 sm:$0x3] %vm141, %v140
  %s144 = scalar_lea.vmem %s1, 132
  %145 = vst.msk [vmem:[%s144] ss:$-24 sm:$0xc] %vm141, %v140
  %s146 = scalar_lea.vmem %s1, 228
  %147 = vst.msk [vmem:[%s146] ss:$-24 sm:$0x30] %vm141, %v140
  %s148 = scalar_lea.vmem %s1, 324
  %149 = vst.msk [vmem:[%s148] ss:$-24 sm:$0xc0] %vm141, %v140
  %v150 = vld.sshfl [vmem:[%s0] sm:$0xff pattern:$0x67452301]
  %151 = vrot.lane.b32.xlu0 %v150, 115
  %v152 = vpop.permute.xlu0 %151
  %vm153 = vcmask 7168
  %s154 = scalar_lea.vmem %s1, 37
  %155 = vst.msk [vmem:[%s154] ss:$-24 sm:$0x3] %vm153, %v152
  %s156 = scalar_lea.vmem %s1, 133
  %157 = vst.msk [vmem:[%s156] ss:$-24 sm:$0xc] %vm153, %v152
  %s158 = scalar_lea.vmem %s1, 229
  %159 = vst.msk [vmem:[%s158] ss:$-24 sm:$0x30] %vm153, %v152
  %s160 = scalar_lea.vmem %s1, 325
  %161 = vst.msk [vmem:[%s160] ss:$-24 sm:$0xc0] %vm153, %v152
  %v162 = vld.sshfl [vmem:[%s0] sm:$0xff pattern:$0x67452301]
  %163 = vrot.lane.b32.xlu0 %v162, 114
  %v164 = vpop.permute.xlu0 %163
  %vm165 = vcmask 7168
  %s166 = scalar_lea.vmem %s1, 38
  %167 = vst.msk [vmem:[%s166] ss:$-24 sm:$0x3] %vm165, %v164
  %s168 = scalar_lea.vmem %s1, 134
  %169 = vst.msk [vmem:[%s168] ss:$-24 sm:$0xc] %vm165, %v164
  %s170 = scalar_lea.vmem %s1, 230
  %171 = vst.msk [vmem:[%s170] ss:$-24 sm:$0x30] %vm165, %v164
  %s172 = scalar_lea.vmem %s1, 326
  %173 = vst.msk [vmem:[%s172] ss:$-24 sm:$0xc0] %vm165, %v164
  %v174 = vld.sshfl [vmem:[%s0] sm:$0xff pattern:$0x67452301]
  %175 = vrot.lane.b32.xlu0 %v174, 113
  %v176 = vpop.permute.xlu0 %175
  %vm177 = vcmask 7168
  %s178 = scalar_lea.vmem %s1, 39
  %179 = vst.msk [vmem:[%s178] ss:$-24 sm:$0x3] %vm177, %v176
  %s180 = scalar_lea.vmem %s1, 135
  %181 = vst.msk [vmem:[%s180] ss:$-24 sm:$0xc] %vm177, %v176
  %s182 = scalar_lea.vmem %s1, 231
  %183 = vst.msk [vmem:[%s182] ss:$-24 sm:$0x30] %vm177, %v176
  %s184 = scalar_lea.vmem %s1, 327
  %185 = vst.msk [vmem:[%s184] ss:$-24 sm:$0xc0] %vm177, %v176
  %v186 = vld.sshfl [vmem:[%s0] sm:$0xff pattern:$0x74563012]
  %187 = vrot.lane.b32.xlu0 %v186, 112
  %v188 = vpop.permute.xlu0 %187
  %vm189 = vcmask 7168
  %s190 = scalar_lea.vmem %s1, 64
  %191 = vst.msk [vmem:[%s190] ss:$-24 sm:$0x7] %vm189, %v188
  %s192 = scalar_lea.vmem %s1, 4294967168
  %193 = vst.msk [vmem:[%s192] ss:$72 sm:$0x18] %vm189, %v188
  %s194 = scalar_lea.vmem %s1, 256
  %195 = vst.msk [vmem:[%s194] ss:$-24 sm:$0x60] %vm189, %v188
  %s196 = scalar_lea.vmem %s1, 177
  %197 = vst.msk [vmem:[%s196] sm:$0x80] %vm189, %v188
  %v198 = vld.sshfl [vmem:[%s0] sm:$0xff pattern:$0x74563012]
  %199 = vrot.lane.b32.xlu0 %v198, 111
  %v200 = vpop.permute.xlu0 %199
  %vm201 = vcmask 7168
  %s202 = scalar_lea.vmem %s1, 65
  %203 = vst.msk [vmem:[%s202] ss:$-24 sm:$0x7] %vm201, %v200
  %s204 = scalar_lea.vmem %s1, 4294967169
  %205 = vst.msk [vmem:[%s204] ss:$72 sm:$0x18] %vm201, %v200
  %s206 = scalar_lea.vmem %s1, 257
  %207 = vst.msk [vmem:[%s206] ss:$-24 sm:$0x60] %vm201, %v200
  %s208 = scalar_lea.vmem %s1, 178
  %209 = vst.msk [vmem:[%s208] sm:$0x80] %vm201, %v200
  %v210 = vld.sshfl [vmem:[%s0] sm:$0xff pattern:$0x74563012]
  %211 = vrot.lane.b32.xlu0 %v210, 110
  %v212 = vpop.permute.xlu0 %211
  %vm213 = vcmask 7168
  %s214 = scalar_lea.vmem %s1, 66
  %215 = vst.msk [vmem:[%s214] ss:$-24 sm:$0x7] %vm213, %v212
  %s216 = scalar_lea.vmem %s1, 4294967170
  %217 = vst.msk [vmem:[%s216] ss:$72 sm:$0x18] %vm213, %v212
  %s218 = scalar_lea.vmem %s1, 258
  %219 = vst.msk [vmem:[%s218] ss:$-24 sm:$0x60] %vm213, %v212
  %s220 = scalar_lea.vmem %s1, 179
  %221 = vst.msk [vmem:[%s220] sm:$0x80] %vm213, %v212
  %v222 = vld.sshfl [vmem:[%s0] sm:$0xff pattern:$0x74563012]
  %223 = vrot.lane.b32.xlu0 %v222, 109
  %v224 = vpop.permute.xlu0 %223
  %vm225 = vcmask 7168
  %s226 = scalar_lea.vmem %s1, 67
  %227 = vst.msk [vmem:[%s226] ss:$-24 sm:$0x7] %vm225, %v224
  %s228 = scalar_lea.vmem %s1, 4294967171
  %229 = vst.msk [vmem:[%s228] ss:$72 sm:$0x18] %vm225, %v224
  %s230 = scalar_lea.vmem %s1, 259
  %231 = vst.msk [vmem:[%s230] ss:$-24 sm:$0x60] %vm225, %v224
  %s232 = scalar_lea.vmem %s1, 180
  %233 = vst.msk [vmem:[%s232] sm:$0x80] %vm225, %v224
  %v234 = vld.sshfl [vmem:[%s0] sm:$0xff pattern:$0x74563012]
  %235 = vrot.lane.b32.xlu0 %v234, 108
  %v236 = vpop.permute.xlu0 %235
  %vm237 = vcmask 7168
  %s238 = scalar_lea.vmem %s1, 68
  %239 = vst.msk [vmem:[%s238] ss:$-24 sm:$0x7] %vm237, %v236
  %s240 = scalar_lea.vmem %s1, 4294967172
  %241 = vst.msk [vmem:[%s240] ss:$72 sm:$0x18] %vm237, %v236
  %s242 = scalar_lea.vmem %s1, 260
  %243 = vst.msk [vmem:[%s242] ss:$-24 sm:$0x60] %vm237, %v236
  %s244 = scalar_lea.vmem %s1, 181
  %245 = vst.msk [vmem:[%s244] sm:$0x80] %vm237, %v236
  %v246 = vld.sshfl [vmem:[%s0] sm:$0xff pattern:$0x74563012]
  %247 = vrot.lane.b32.xlu0 %v246, 107
  %v248 = vpop.permute.xlu0 %247
  %vm249 = vcmask 7168
  %s250 = scalar_lea.vmem %s1, 69
  %251 = vst.msk [vmem:[%s250] ss:$-24 sm:$0x7] %vm249, %v248
  %s252 = scalar_lea.vmem %s1, 4294967173
  %253 = vst.msk [vmem:[%s252] ss:$72 sm:$0x18] %vm249, %v248
  %s254 = scalar_lea.vmem %s1, 261
  %255 = vst.msk [vmem:[%s254] ss:$-24 sm:$0x60] %vm249, %v248
  %s256 = scalar_lea.vmem %s1, 182
  %257 = vst.msk [vmem:[%s256] sm:$0x80] %vm249, %v248
  %v258 = vld.sshfl [vmem:[%s0] sm:$0xff pattern:$0x74563012]
  %259 = vrot.lane.b32.xlu0 %v258, 106
  %v260 = vpop.permute.xlu0 %259
  %vm261 = vcmask 7168
  %s262 = scalar_lea.vmem %s1, 70
  %263 = vst.msk [vmem:[%s262] ss:$-24 sm:$0x7] %vm261, %v260
  %s264 = scalar_lea.vmem %s1, 4294967174
  %265 = vst.msk [vmem:[%s264] ss:$72 sm:$0x18] %vm261, %v260
  %s266 = scalar_lea.vmem %s1, 262
  %267 = vst.msk [vmem:[%s266] ss:$-24 sm:$0x60] %vm261, %v260
  %s268 = scalar_lea.vmem %s1, 183
  %269 = vst.msk [vmem:[%s268] sm:$0x80] %vm261, %v260
  %v270 = vld.sshfl [vmem:[%s0] sm:$0xff pattern:$0x74563012]
  %271 = vrot.lane.b32.xlu0 %v270, 105
  %v272 = vpop.permute.xlu0 %271
  %vm273 = vcmask 7168
  %s274 = scalar_lea.vmem %s1, 71
  %275 = vst.msk [vmem:[%s274] ss:$-24 sm:$0x7] %vm273, %v272
  %s276 = scalar_lea.vmem %s1, 4294967175
  %277 = vst.msk [vmem:[%s276] ss:$72 sm:$0x18] %vm273, %v272
  %s278 = scalar_lea.vmem %s1, 263
  %279 = vst.msk [vmem:[%s278] ss:$-24 sm:$0x60] %vm273, %v272
  %s280 = scalar_lea.vmem %s1, 184
  %281 = vst.msk [vmem:[%s280] sm:$0x80] %vm273, %v272

// kernel: conv_block_forward.1
$region0: #{conv_block_forward.1}
  #allocation0 [shape = 'u32[]', space=smem, size = 0x4, offset = 0x4, fixed_abs, tag = 'smem constant byte address 0x4 - core index']
  #allocation1 [shape = 'u32[144,128]{1,0:T(1,128)}', space=vmem, size = 0x12000, scoped, tag = 'internal scratch']
  %s0 = inlined_call_operand.vmem [shape: bf16[2,432,12], index: 0, kind: input, shape index: {}]
  %s1 = inlined_call_operand.vmem [shape: bf16[3,12,128], index: 1, kind: input, shape index: {}]
  %s2 = inlined_call_operand.vmem [shape: f32[192,1], index: 2, kind: input, shape index: {}]
  %s3 = inlined_call_operand.vmem [shape: bf16[2,384,128], index: 3, kind: output, shape index: {0}]
  %s4 = inlined_call_operand.vmem [shape: f32[2,2,2,128], index: 4, kind: output, shape index: {1}]
  %5 = xla_tuple %s3, %s4
  %s6 = sld [smem:[#allocation0]]
  $region53: #{conv_block_forward.1} parent=0
    _
  %s8 = ssub.s32 1, %s6
  %s9 = scalar_select 0, %s8, %s6
  loop: start=0, step=1, limit=6
  $region2: #{conv_block_forward.1} parent=0 // loop_pre_header
    _
  $region3: #{conv_block_forward.1} parent=0 // loop_header
    %s11 = sphi 0, %s15
    %p12 = scmp.ge.s32.totalorder %s11, 6
    %s18 = sphi 0, %s30
    %s19 = sphi 0, %s26
    %s20 = sphi 0, %s18
    %s21 = sphi 0, %s19
    %s22 = sphi 0, %s20
    %s23 = sphi 0, %s21
    %s33 = sphi 0, %s35
    %s36 = sphi 0, %s33
    %s37 = sphi 0, %s36
    %s53 = sphi 0, %s37
    %s57 = sphi 0, %s57
    %s59 = sphi 0, %s57
    %s60 = sphi 0, %s59
    %s74 = sphi 0, %s60
    %s78 = sphi 0, %s78
    %s80 = sphi 0, %s78
    %s81 = sphi 0, %s80
    %s95 = sphi 0, %s81
    %s103 = sphi 0, %s105
    %s106 = sphi 0, %s103
    %s107 = sphi 0, %s106
    %s123 = sphi 0, %s107
    %s131 = sphi 0, %s133
    %s134 = sphi 0, %s131
    %s135 = sphi 0, %s134
    %s151 = sphi 0, %s135
  $region4: #{conv_block_forward.1} parent=0 // loop_header_branch
    %14 = sbr.rel (%p12) target = $region8
  $region5: #{conv_block_forward.1} parent=0 // loop_body
    %s16 = ssub.s32 %s11, 1
    %s17 = ssub.s32 %s11, 2
    %s24 = sadd.s32 1, %s19
    %p25 = scmp.ge.s32.totalorder %s24, 2
    %s26 = scalar_select %p25, 0, %s24
    %s27 = sadd.s32 1, %s18
    %s28 = scalar_select %p25, %s27, %s18
    %p29 = scmp.ge.s32.totalorder %s28, 2
    %s30 = scalar_select %p29, 0, %s28
    %s31 = ssub.s32 %s18, %s30
    %p32 = scmp.eq.s32.totalorder %s31, 0
    %s34 = sadd.s32 %s33, 1
    %s35 = scalar_select %p32, %s33, %s34
    %p38 = pneg %p32
    %p39 = scmp.eq.s32.totalorder %s11, 3
    %p40 = por %p38, %p39
    %p41 = scmp.ne.s32.totalorder %s33, %s36
    %p42 = scmp.eq.s32.totalorder %s11, 0
    %p43 = por %p41, %p42
    %p44 = scmp.ne.s32.totalorder %s33, %s36
    %p45 = scmp.eq.s32.totalorder %s16, 3
    %p46 = por %p44, %p45
    %p47 = scmp.ne.s32.totalorder %s36, %s37
    %p48 = scmp.eq.s32.totalorder %s16, 0
    %p49 = por %p47, %p48
    %p50 = scmp.ne.s32.totalorder %s36, %s37
    %p51 = scmp.eq.s32.totalorder %s17, 3
    %p52 = por %p50, %p51
    %p54 = scmp.ne.s32.totalorder %s37, %s53
    %p55 = scmp.eq.s32.totalorder %s17, 0
    %p56 = por %p54, %p55
    %s58 = sadd.s32 %s57, 1
    %p61 = scmp.eq.s32.totalorder %s11, 3
    %p62 = scmp.ne.s32.totalorder %s57, %s59
    %p63 = scmp.eq.s32.totalorder %s11, 0
    %p64 = por %p62, %p63
    %p65 = scmp.ne.s32.totalorder %s57, %s59
    %p66 = scmp.eq.s32.totalorder %s16, 3
    %p67 = por %p65, %p66
    %p68 = scmp.ne.s32.totalorder %s59, %s60
    %p69 = scmp.eq.s32.totalorder %s16, 0
    %p70 = por %p68, %p69
    %p71 = scmp.ne.s32.totalorder %s59, %s60
    %p72 = scmp.eq.s32.totalorder %s17, 3
    %p73 = por %p71, %p72
    %p75 = scmp.ne.s32.totalorder %s60, %s74
    %p76 = scmp.eq.s32.totalorder %s17, 0
    %p77 = por %p75, %p76
    %s79 = sadd.s32 %s78, 1
    %p82 = scmp.eq.s32.totalorder %s11, 3
    %p83 = scmp.ne.s32.totalorder %s78, %s80
    %p84 = scmp.eq.s32.totalorder %s11, 0
    %p85 = por %p83, %p84
    %p86 = scmp.ne.s32.totalorder %s78, %s80
    %p87 = scmp.eq.s32.totalorder %s16, 3
    %p88 = por %p86, %p87
    %p89 = scmp.ne.s32.totalorder %s80, %s81
    %p90 = scmp.eq.s32.totalorder %s16, 0
    %p91 = por %p89, %p90
    %p92 = scmp.ne.s32.totalorder %s80, %s81
    %p93 = scmp.eq.s32.totalorder %s17, 3
    %p94 = por %p92, %p93
    %p96 = scmp.ne.s32.totalorder %s81, %s95
    %p97 = scmp.eq.s32.totalorder %s17, 0
    %p98 = por %p96, %p97
    %s99 = ssub.s32 %s18, %s30
    %s100 = ssub.s32 %s19, %s26
    %s101 = sor.u32 %s99, %s100
    %p102 = scmp.eq.s32.totalorder %s101, 0
    %s104 = sadd.s32 %s103, 1
    %s105 = scalar_select %p102, %s103, %s104
    %p108 = pneg %p102
    %p109 = scmp.eq.s32.totalorder %s11, 3
    %p110 = por %p108, %p109
    %p111 = scmp.ne.s32.totalorder %s103, %s106
    %p112 = scmp.eq.s32.totalorder %s11, 0
    %p113 = por %p111, %p112
    %p114 = scmp.ne.s32.totalorder %s103, %s106
    %p115 = scmp.eq.s32.totalorder %s16, 3
    %p116 = por %p114, %p115
    %p117 = scmp.ne.s32.totalorder %s106, %s107
    %p118 = scmp.eq.s32.totalorder %s16, 0
    %p119 = por %p117, %p118
    %p120 = scmp.ne.s32.totalorder %s106, %s107
    %p121 = scmp.eq.s32.totalorder %s17, 3
    %p122 = por %p120, %p121
    %p124 = scmp.ne.s32.totalorder %s107, %s123
    %p125 = scmp.eq.s32.totalorder %s17, 0
    %p126 = por %p124, %p125
    %s127 = ssub.s32 %s18, %s30
    %s128 = ssub.s32 %s19, %s26
    %s129 = sor.u32 %s127, %s128
    %p130 = scmp.eq.s32.totalorder %s129, 0
    %s132 = sadd.s32 %s131, 1
    %s133 = scalar_select %p130, %s131, %s132
    %p136 = pneg %p130
    %p137 = scmp.eq.s32.totalorder %s11, 3
    %p138 = por %p136, %p137
    %p139 = scmp.ne.s32.totalorder %s131, %s134
    %p140 = scmp.eq.s32.totalorder %s11, 0
    %p141 = por %p139, %p140
    %p142 = scmp.ne.s32.totalorder %s131, %s134
    %p143 = scmp.eq.s32.totalorder %s16, 3
    %p144 = por %p142, %p143
    %p145 = scmp.ne.s32.totalorder %s134, %s135
    %p146 = scmp.eq.s32.totalorder %s16, 0
    %p147 = por %p145, %p146
    %p148 = scmp.ne.s32.totalorder %s134, %s135
    %p149 = scmp.eq.s32.totalorder %s17, 3
    %p150 = por %p148, %p149
    %p152 = scmp.ne.s32.totalorder %s135, %s151
    %p153 = scmp.eq.s32.totalorder %s17, 0
    %p154 = por %p152, %p153
    %p155 = scmp.le.s32.totalorder 1, %s11
    %p156 = scmp.lt.s32.totalorder %s11, 5
    %p157 = pnand %p155, %p156
    %p158 = pneg %p157
    // Predicated region
    $region9: #{conv_block_forward.1} parent=5 // pred_check
      _
    $region10: #{conv_block_forward.1} parent=5 // pred_check_branch
      %160 = sbr.rel (%p157) target = $region12
    $region11: #{conv_block_forward.1} parent=5 // pred_region
      %s161 = ssub.s32 %s11, 1
      // Predicated region
      $region13: #{conv_block_forward.1} parent=11 // pred_check
        %p162 = pneg %p70
      $region14: #{conv_block_forward.1} parent=11 // pred_check_branch
        %164 = sbr.rel (%p162) target = $region16
      $region15: #{conv_block_forward.1} parent=11 // pred_region
        _
      $region16: #{conv_block_forward.1} parent=11 // pred_fallthru
        _
      // Predicated region
      $region17: #{conv_block_forward.1} parent=11 // pred_check
        %p165 = pneg %p91
      $region18: #{conv_block_forward.1} parent=11 // pred_check_branch
        %167 = sbr.rel (%p165) target = $region20
      $region19: #{conv_block_forward.1} parent=11 // pred_region
        _
      $region20: #{conv_block_forward.1} parent=11 // pred_fallthru
        _
    $region12: #{conv_block_forward.1} parent=5 // pred_fallthru
      _
    %p168 = scmp.lt.s32.totalorder %s11, 4
    // Predicated region
    $region21: #{conv_block_forward.1} parent=5 // pred_check
      %p169 = pneg %p168
    $region22: #{conv_block_forward.1} parent=5 // pred_check_branch
      %171 = sbr.rel (%p169) target = $region24
    $region23: #{conv_block_forward.1} parent=5 // pred_region
      // Predicated region
      $region25: #{conv_block_forward.1} parent=23 // pred_check
        %p172 = pneg %p43
      $region26: #{conv_block_forward.1} parent=23 // pred_check_branch
        %174 = sbr.rel (%p172) target = $region28
      $region27: #{conv_block_forward.1} parent=23 // pred_region
        %p175 = scmp.lt.s32.totalorder %s18, 1
        %s176 = scalar_select %p175, %s18, 1
        %s177 = smul.addr %s176, 54
        %s178 = smul.addr %s177, 4
        %s179 = scalar_lea.vmem %s0, %s178
      $region28: #{conv_block_forward.1} parent=23 // pred_fallthru
        _
    $region24: #{conv_block_forward.1} parent=5 // pred_fallthru
      _
    %p180 = scmp.le.s32.totalorder 1, %s11
    %p181 = scmp.lt.s32.totalorder %s11, 5
    %p182 = pnand %p180, %p181
    %p183 = pneg %p182
    // Predicated region
    $region29: #{conv_block_forward.1} parent=5 // pred_check
      _
    $region30: #{conv_block_forward.1} parent=5 // pred_check_branch
      %185 = sbr.rel (%p182) target = $region32
    $region31: #{conv_block_forward.1} parent=5 // pred_region
      %s186 = ssub.s32 %s11, 1
      %p187 = scmp.lt.s32.totalorder %s20, 1
      %s188 = scalar_select %p187, %s20, 1
      %s189 = smul.addr %s188, 54
      %s190 = smul.addr %s189, 4
      %s191 = scalar_lea.vmem %s0, %s190
      %p192 = pneg %p49
      %p193 = pneg %p46
      %p194 = pneg %p70
      %p195 = pneg %p67
      %p196 = pneg %p91
      %p197 = pneg %p88
      %p198 = pneg %p119
      %p199 = pneg %p116
      %s200 = smul.u32 24, %s21
      %p201 = scmp.lt.s32.totalorder %s20, 1
      %s202 = scalar_select %p201, %s20, 1
      %p203 = scmp.lt.s32.totalorder %s200, 47
      %s204 = scalar_select %p203, %s200, 47
      %s205 = smul.addr %s202, 48
      %s206 = sadd.s32 %s204, %s205
      %s207 = smul.addr %s206, 4
      %s208 = scalar_lea.vmem %s3, %s207
      %p209 = pneg %p147
      %p210 = pneg %p144
      %p211 = scmp.lt.s32.totalorder %s20, 1
      %s212 = scalar_select %p211, %s20, 1
      %p213 = scmp.lt.s32.totalorder %s21, 1
      %s214 = scalar_select %p213, %s21, 1
      %s215 = smul.addr %s212, 2
      %s216 = sadd.s32 %s214, %s215
      %s217 = smul.addr %s216, 2
      %s218 = scalar_lea.vmem %s4, %s217
      %p219 = scmp.lt.s32.totalorder %s20, 1
      %s220 = scalar_select %p219, %s20, 1
      %s221 = smul.addr %s220, 54
      %s222 = smul.addr %s221, 4
      %s223 = scalar_lea.vmem %s0, %s222
      %s224 = smul.u32 24, %s21
      %p225 = scmp.lt.s32.totalorder %s20, 1
      %s226 = scalar_select %p225, %s20, 1
      %p227 = scmp.lt.s32.totalorder %s224, 47
      %s228 = scalar_select %p227, %s224, 47
      %s229 = smul.addr %s226, 48
      %s230 = sadd.s32 %s228, %s229
      %s231 = smul.addr %s230, 4
      %s232 = scalar_lea.vmem %s3, %s231
      %s233 = smul.u32 24, %s21
      %p234 = scmp.lt.s32.totalorder %s20, 1
      %s235 = scalar_select %p234, %s20, 1
      %p236 = scmp.lt.s32.totalorder %s21, 1
      %s237 = scalar_select %p236, %s21, 1
      %s238 = smul.addr %s235, 2
      %s239 = sadd.s32 %s237, %s238
      %s240 = smul.addr %s239, 2
      %s241 = scalar_lea.vmem %s4, %s240
      %s243 = smul.u32 %s21, 192
      %s244 = sshra.s32 %s243, 3
      %s245 = sand.u32 %s243, 7
      %s246 = smul.addr %s244, 4
      %s247 = scalar_lea.vmem %s223, %s246
      %v248 = vld [vmem:[%s247] sm:$0xf]
      %v249 = vld [vmem:[%s247 + $0x4] sm:$0xf]
      %v250 = vld [vmem:[%s247 + $0x8] sm:$0xf]
      %v251 = vld [vmem:[%s247 + $0xc] sm:$0xf]
      %v252 = vld [vmem:[%s247 + $0x10] sm:$0xf]
      %v253 = vld [vmem:[%s247 + $0x14] sm:$0xf]
      %v254 = vld [vmem:[%s247 + $0x18] sm:$0xf]
      %v255 = vld [vmem:[%s247 + $0x1c] sm:$0xf]
      %v256 = vld [vmem:[%s247 + $0x20] sm:$0xf]
      %v257 = vld [vmem:[%s247 + $0x24] sm:$0xf]
      %v258 = vld [vmem:[%s247 + $0x28] sm:$0xf]
      %v259 = vld [vmem:[%s247 + $0x2c] sm:$0xf]
      %v260 = vld [vmem:[%s247 + $0x30] sm:$0xf]
      %v261 = vld [vmem:[%s247 + $0x34] sm:$0xf]
      %v262 = vld [vmem:[%s247 + $0x38] sm:$0xf]
      %v263 = vld [vmem:[%s247 + $0x3c] sm:$0xf]
      %v264 = vld [vmem:[%s247 + $0x40] sm:$0xf]
      %v265 = vld [vmem:[%s247 + $0x44] sm:$0xf]
      %v266 = vld [vmem:[%s247 + $0x48] sm:$0xf]
      %v267 = vld [vmem:[%s247 + $0x4c] sm:$0xf]
      %v268 = vld [vmem:[%s247 + $0x50] sm:$0xf]
      %v269 = vld [vmem:[%s247 + $0x54] sm:$0xf]
      %v270 = vld [vmem:[%s247 + $0x58] sm:$0xf]
      %v271 = vld [vmem:[%s247 + $0x5c] sm:$0xf]
      %v272 = vld [vmem:[%s1] sm:$0xf]
      %v273 = vld [vmem:[%s1 + $0x4] sm:$0x3]
      %s274 = sadd.s32 %s243, 24
      %s275 = sshra.s32 %s274, 3
      %s276 = sand.u32 %s274, 7
      %s277 = smul.addr %s275, 4
      %s278 = scalar_lea.vmem %s223, %s277
      %v279 = vld [vmem:[%s278] sm:$0xf]
      %v280 = vld [vmem:[%s278 + $0x4] sm:$0xf]
      %v281 = vld [vmem:[%s278 + $0x8] sm:$0xf]
      %v282 = vld [vmem:[%s278 + $0xc] sm:$0xf]
      %v283 = vld [vmem:[%s278 + $0x10] sm:$0xf]
      %v284 = vld [vmem:[%s278 + $0x14] sm:$0xf]
      %v285 = vld [vmem:[%s278 + $0x18] sm:$0xf]
      %v286 = vld [vmem:[%s278 + $0x1c] sm:$0xf]
      %v287 = vld [vmem:[%s278 + $0x20] sm:$0xf]
      %v288 = vld [vmem:[%s278 + $0x24] sm:$0xf]
      %v289 = vld [vmem:[%s278 + $0x28] sm:$0xf]
      %v290 = vld [vmem:[%s278 + $0x2c] sm:$0xf]
      %v291 = vld [vmem:[%s278 + $0x30] sm:$0xf]
      %v292 = vld [vmem:[%s278 + $0x34] sm:$0xf]
      %v293 = vld [vmem:[%s278 + $0x38] sm:$0xf]
      %v294 = vld [vmem:[%s278 + $0x3c] sm:$0xf]
      %v295 = vld [vmem:[%s278 + $0x40] sm:$0xf]
      %v296 = vld [vmem:[%s278 + $0x44] sm:$0xf]
      %v297 = vld [vmem:[%s278 + $0x48] sm:$0xf]
      %v298 = vld [vmem:[%s278 + $0x4c] sm:$0xf]
      %v299 = vld [vmem:[%s278 + $0x50] sm:$0xf]
      %v300 = vld [vmem:[%s278 + $0x54] sm:$0xf]
      %v301 = vld [vmem:[%s278 + $0x58] sm:$0xf]
      %v302 = vld [vmem:[%s278 + $0x5c] sm:$0xf]
      %s303 = scalar_lea.vmem %s1, 8
      %v304 = vld [vmem:[%s303] sm:$0xf]
      %v305 = vld [vmem:[%s303 + $0x4] sm:$0x3]
      %v330 = vunpack.c.l.b16 %v279
      %v331 = vunpack.c.l.b16 %v280
      %v332 = vunpack.c.l.b16 %v281
      %v333 = vunpack.c.l.b16 %v282
      %v334 = vunpack.c.l.b16 %v283
      %v335 = vunpack.c.l.b16 %v284
      %v336 = vunpack.c.l.b16 %v285
      %v337 = vunpack.c.l.b16 %v286
      %v338 = vunpack.c.l.b16 %v287
      %v339 = vunpack.c.l.b16 %v288
      %v340 = vunpack.c.l.b16 %v289
      %v341 = vunpack.c.l.b16 %v290
      %v342 = vunpack.c.l.b16 %v291
      %v343 = vunpack.c.l.b16 %v292
      %v344 = vunpack.c.l.b16 %v293
      %v345 = vunpack.c.l.b16 %v294
      %v346 = vunpack.c.l.b16 %v295
      %v347 = vunpack.c.l.b16 %v296
      %v348 = vunpack.c.l.b16 %v297
      %v349 = vunpack.c.l.b16 %v298
      %v350 = vunpack.c.l.b16 %v299
      %v351 = vunpack.c.l.b16 %v300
      %v352 = vunpack.c.l.b16 %v301
      %v353 = vunpack.c.l.b16 %v302
      %v354 = vpack.c.b16 %v331, %v330
      %v355 = vpack.c.b16 %v333, %v332
      %v356 = vpack.c.b16 %v335, %v334
      %v357 = vpack.c.b16 %v337, %v336
      %v358 = vpack.c.b16 %v339, %v338
      %v359 = vpack.c.b16 %v341, %v340
      %v360 = vpack.c.b16 %v343, %v342
      %v361 = vpack.c.b16 %v345, %v344
      %v362 = vpack.c.b16 %v347, %v346
      %v363 = vpack.c.b16 %v349, %v348
      %v364 = vpack.c.b16 %v351, %v350
      %v365 = vpack.c.b16 %v353, %v352
      %v368 = vunpack.c.l.b16 %v304
      %v369 = vunpack.c.l.b16 %v305
      %v370 = vpack.c.b16 %v369, %v368
      %vm371 = vcmask 97280
      %v373 = vsel %vm371, %v354, 0
      %v376 = vsel %vm371, %v355, 0
      %v379 = vsel %vm371, %v356, 0
      %v382 = vsel %vm371, %v357, 0
      %v385 = vsel %vm371, %v358, 0
      %v388 = vsel %vm371, %v359, 0
      %v391 = vsel %vm371, %v360, 0
      %v394 = vsel %vm371, %v361, 0
      %v397 = vsel %vm371, %v362, 0
      %v400 = vsel %vm371, %v363, 0
      %v403 = vsel %vm371, %v364, 0
      %v406 = vsel %vm371, %v365, 0
      %vm408 = vcmask 1045504
      %v410 = vsel %vm408, %v370, 0
      %412 = vmatprep.subr.bf16.mxu0 0
      %413 = vmatpush1.bf16.msra.mxu0 0
      %414 = vmatprep.subr.bf16.mxu0 0
      %415 = vmatpush1.bf16.msra.mxu0 0
      %416 = vmatprep.subr.bf16.mxu0 0
      %417 = vmatpush1.bf16.msra.mxu0 0
      %418 = vmatprep.subr.bf16.mxu0 0
      %419 = vmatpush1.bf16.msra.mxu0 0
      %420 = vmatprep.subr.bf16.mxu0 0
      %421 = vmatpush1.bf16.msra.mxu0 0
      %422 = vmatprep.subr.bf16.mxu0 0
      %423 = vmatpush1.bf16.msra.mxu0 0
      %424 = vmatprep.subr.bf16.mxu0 0
      %425 = vmatpush1.bf16.msra.mxu0 0
      %426 = vmatprep.subr.bf16.mxu0 0
      %427 = vmatpush1.bf16.msra.mxu0 %v410
      %428 = vmatprep.subr.bf16.mxu0 0
      %429 = vmatpush2.bf16.msra.mxu0 0
      %430 = vmatprep.subr.bf16.mxu0 0
      %431 = vmatpush2.bf16.msra.mxu0 0
      %432 = vmatprep.subr.bf16.mxu0 0
      %433 = vmatpush2.bf16.msra.mxu0 0
      %434 = vmatprep.subr.bf16.mxu0 0
      %435 = vmatpush2.bf16.msra.mxu0 0
      %436 = vmatprep.subr.bf16.mxu0 0
      %437 = vmatpush2.bf16.msra.mxu0 0
      %438 = vmatprep.subr.bf16.mxu0 0
      %439 = vmatpush2.bf16.msra.mxu0 0
      %440 = vmatprep.subr.bf16.mxu0 0
      %441 = vmatpush2.bf16.msra.mxu0 0
      %442 = vmatprep.subr.bf16.mxu0 0
      %443 = vmatpush2.bf16.msra.mxu0 0
      %444 = vmatprep.mubr.bf16.mxu0 0
      %445 = vmatmul.mubr.bf16.gmra.mxu0 %v373
      %v446 = vpop.f32.mrf.mxu0
      %v447 = vadd.f32 0.0, %v446
      %v448 = vpop.f32.mrf.mxu0
      %v449 = vpop.f32.mrf.mxu0
      %v450 = vadd.f32 0.0, %v449
      %v451 = vpop.f32.mrf.mxu0
      %452 = vmatprep.mubr.bf16.mxu0 0
      %453 = vmatmul.mubr.bf16.gmra.mxu0 %v376
      %v454 = vpop.f32.mrf.mxu0
      %v455 = vadd.f32 0.0, %v454
      %v456 = vpop.f32.mrf.mxu0
      %v457 = vpop.f32.mrf.mxu0
      %v458 = vadd.f32 0.0, %v457
      %v459 = vpop.f32.mrf.mxu0
      %460 = vmatprep.mubr.bf16.mxu0 0
      %461 = vmatmul.mubr.bf16.gmra.mxu0 %v379
      %v462 = vpop.f32.mrf.mxu0
      %v463 = vadd.f32 0.0, %v462
      %v464 = vpop.f32.mrf.mxu0
      %v465 = vpop.f32.mrf.mxu0
      %v466 = vadd.f32 0.0, %v465
      %v467 = vpop.f32.mrf.mxu0
      %468 = vmatprep.mubr.bf16.mxu0 0
      %469 = vmatmul.mubr.bf16.gmra.mxu0 %v382
      %v470 = vpop.f32.mrf.mxu0
      %v471 = vadd.f32 0.0, %v470
      %v472 = vpop.f32.mrf.mxu0
      %v473 = vpop.f32.mrf.mxu0
      %v474 = vadd.f32 0.0, %v473
      %v475 = vpop.f32.mrf.mxu0
      %476 = vmatprep.mubr.bf16.mxu0 0
      %477 = vmatmul.mubr.bf16.gmra.mxu0 %v385
      %v478 = vpop.f32.mrf.mxu0
      %v479 = vadd.f32 0.0, %v478
      %v480 = vpop.f32.mrf.mxu0
      %v481 = vpop.f32.mrf.mxu0
      %v482 = vadd.f32 0.0, %v481
      %v483 = vpop.f32.mrf.mxu0
      %484 = vmatprep.mubr.bf16.mxu0 0
      %485 = vmatmul.mubr.bf16.gmra.mxu0 %v388
      %v486 = vpop.f32.mrf.mxu0
      %v487 = vadd.f32 0.0, %v486
      %v488 = vpop.f32.mrf.mxu0
      %v489 = vpop.f32.mrf.mxu0
      %v490 = vadd.f32 0.0, %v489
      %v491 = vpop.f32.mrf.mxu0
      %492 = vmatprep.mubr.bf16.mxu0 0
      %493 = vmatmul.mubr.bf16.gmra.mxu0 %v391
      %v494 = vpop.f32.mrf.mxu0
      %v495 = vadd.f32 0.0, %v494
      %v496 = vpop.f32.mrf.mxu0
      %v497 = vpop.f32.mrf.mxu0
      %v498 = vadd.f32 0.0, %v497
      %v499 = vpop.f32.mrf.mxu0
      %500 = vmatprep.mubr.bf16.mxu0 0
      %501 = vmatmul.mubr.bf16.gmra.mxu0 %v394
      %v502 = vpop.f32.mrf.mxu0
      %v503 = vadd.f32 0.0, %v502
      %v504 = vpop.f32.mrf.mxu0
      %v505 = vpop.f32.mrf.mxu0
      %v506 = vadd.f32 0.0, %v505
      %v507 = vpop.f32.mrf.mxu0
      %508 = vmatprep.mubr.bf16.mxu0 0
      %509 = vmatmul.mubr.bf16.gmra.mxu0 %v397
      %v510 = vpop.f32.mrf.mxu0
      %v511 = vadd.f32 0.0, %v510
      %v512 = vpop.f32.mrf.mxu0
      %v513 = vpop.f32.mrf.mxu0
      %v514 = vadd.f32 0.0, %v513
      %v515 = vpop.f32.mrf.mxu0
      %516 = vmatprep.mubr.bf16.mxu0 0
      %517 = vmatmul.mubr.bf16.gmra.mxu0 %v400
      %v518 = vpop.f32.mrf.mxu0
      %v519 = vadd.f32 0.0, %v518
      %v520 = vpop.f32.mrf.mxu0
      %v521 = vpop.f32.mrf.mxu0
      %v522 = vadd.f32 0.0, %v521
      %v523 = vpop.f32.mrf.mxu0
      %524 = vmatprep.mubr.bf16.mxu0 0
      %525 = vmatmul.mubr.bf16.gmra.mxu0 %v403
      %v526 = vpop.f32.mrf.mxu0
      %v527 = vadd.f32 0.0, %v526
      %v528 = vpop.f32.mrf.mxu0
      %v529 = vpop.f32.mrf.mxu0
      %v530 = vadd.f32 0.0, %v529
      %v531 = vpop.f32.mrf.mxu0
      %532 = vmatprep.mubr.bf16.mxu0 0
      %533 = vmatmul.mubr.bf16.gmra.mxu0 %v406
      %v534 = vpop.f32.mrf.mxu0
      %v535 = vadd.f32 0.0, %v534
      %v536 = vpop.f32.mrf.mxu0
      %v537 = vpop.f32.mrf.mxu0
      %v538 = vadd.f32 0.0, %v537
      %v539 = vpop.f32.mrf.mxu0
      %540 = vdwg.mxu0
      %v565 = vunpack.c.l.b16 %v248
      %v566 = vunpack.c.l.b16 %v249
      %v567 = vunpack.c.l.b16 %v250
      %v568 = vunpack.c.l.b16 %v251
      %v569 = vunpack.c.l.b16 %v252
      %v570 = vunpack.c.l.b16 %v253
      %v571 = vunpack.c.l.b16 %v254
      %v572 = vunpack.c.l.b16 %v255
      %v573 = vunpack.c.l.b16 %v256
      %v574 = vunpack.c.l.b16 %v257
      %v575 = vunpack.c.l.b16 %v258
      %v576 = vunpack.c.l.b16 %v259
      %v577 = vunpack.c.l.b16 %v260
      %v578 = vunpack.c.l.b16 %v261
      %v579 = vunpack.c.l.b16 %v262
      %v580 = vunpack.c.l.b16 %v263
      %v581 = vunpack.c.l.b16 %v264
      %v582 = vunpack.c.l.b16 %v265
      %v583 = vunpack.c.l.b16 %v266
      %v584 = vunpack.c.l.b16 %v267
      %v585 = vunpack.c.l.b16 %v268
      %v586 = vunpack.c.l.b16 %v269
      %v587 = vunpack.c.l.b16 %v270
      %v588 = vunpack.c.l.b16 %v271
      %v589 = vpack.c.b16 %v566, %v565
      %v590 = vpack.c.b16 %v568, %v567
      %v591 = vpack.c.b16 %v570, %v569
      %v592 = vpack.c.b16 %v572, %v571
      %v593 = vpack.c.b16 %v574, %v573
      %v594 = vpack.c.b16 %v576, %v575
      %v595 = vpack.c.b16 %v578, %v577
      %v596 = vpack.c.b16 %v580, %v579
      %v597 = vpack.c.b16 %v582, %v581
      %v598 = vpack.c.b16 %v584, %v583
      %v599 = vpack.c.b16 %v586, %v585
      %v600 = vpack.c.b16 %v588, %v587
      %v603 = vunpack.c.l.b16 %v272
      %v604 = vunpack.c.l.b16 %v273
      %v605 = vpack.c.b16 %v604, %v603
      %v607 = vsel %vm371, %v589, 0
      %v610 = vsel %vm371, %v590, 0
      %v613 = vsel %vm371, %v591, 0
      %v616 = vsel %vm371, %v592, 0
      %v619 = vsel %vm371, %v593, 0
      %v622 = vsel %vm371, %v594, 0
      %v625 = vsel %vm371, %v595, 0
      %v628 = vsel %vm371, %v596, 0
      %v631 = vsel %vm371, %v597, 0
      %v634 = vsel %vm371, %v598, 0
      %v637 = vsel %vm371, %v599, 0
      %v640 = vsel %vm371, %v600, 0
      %v643 = vsel %vm408, %v605, 0
      %645 = vmatprep.subr.bf16.mxu0 0
      %646 = vmatpush1.bf16.msra.mxu0 0
      %647 = vmatprep.subr.bf16.mxu0 0
      %648 = vmatpush1.bf16.msra.mxu0 0
      %649 = vmatprep.subr.bf16.mxu0 0
      %650 = vmatpush1.bf16.msra.mxu0 0
      %651 = vmatprep.subr.bf16.mxu0 0
      %652 = vmatpush1.bf16.msra.mxu0 0
      %653 = vmatprep.subr.bf16.mxu0 0
      %654 = vmatpush1.bf16.msra.mxu0 0
      %655 = vmatprep.subr.bf16.mxu0 0
      %656 = vmatpush1.bf16.msra.mxu0 0
      %657 = vmatprep.subr.bf16.mxu0 0
      %658 = vmatpush1.bf16.msra.mxu0 0
      %659 = vmatprep.subr.bf16.mxu0 0
      %660 = vmatpush1.bf16.msra.mxu0 %v643
      %661 = vmatprep.subr.bf16.mxu0 0
      %662 = vmatpush2.bf16.msra.mxu0 0
      %663 = vmatprep.subr.bf16.mxu0 0
      %664 = vmatpush2.bf16.msra.mxu0 0
      %665 = vmatprep.subr.bf16.mxu0 0
      %666 = vmatpush2.bf16.msra.mxu0 0
      %667 = vmatprep.subr.bf16.mxu0 0
      %668 = vmatpush2.bf16.msra.mxu0 0
      %669 = vmatprep.subr.bf16.mxu0 0
      %670 = vmatpush2.bf16.msra.mxu0 0
      %671 = vmatprep.subr.bf16.mxu0 0
      %672 = vmatpush2.bf16.msra.mxu0 0
      %673 = vmatprep.subr.bf16.mxu0 0
      %674 = vmatpush2.bf16.msra.mxu0 0
      %675 = vmatprep.subr.bf16.mxu0 0
      %676 = vmatpush2.bf16.msra.mxu0 0
      %677 = vmatprep.mubr.bf16.mxu0 0
      %678 = vmatmul.mubr.bf16.gmra.mxu0 %v607
      %v679 = vpop.f32.mrf.mxu0
      %v680 = vadd.f32 %v447, %v679
      %v681 = vpop.f32.mrf.mxu0
      %v682 = vpop.f32.mrf.mxu0
      %v683 = vadd.f32 %v450, %v682
      %v684 = vpop.f32.mrf.mxu0
      %685 = vmatprep.mubr.bf16.mxu0 0
      %686 = vmatmul.mubr.bf16.gmra.mxu0 %v610
      %v687 = vpop.f32.mrf.mxu0
      %v688 = vadd.f32 %v455, %v687
      %v689 = vpop.f32.mrf.mxu0
      %v690 = vpop.f32.mrf.mxu0
      %v691 = vadd.f32 %v458, %v690
      %v692 = vpop.f32.mrf.mxu0
      %693 = vmatprep.mubr.bf16.mxu0 0
      %694 = vmatmul.mubr.bf16.gmra.mxu0 %v613
      %v695 = vpop.f32.mrf.mxu0
      %v696 = vadd.f32 %v463, %v695
      %v697 = vpop.f32.mrf.mxu0
      %v698 = vpop.f32.mrf.mxu0
      %v699 = vadd.f32 %v466, %v698
      %v700 = vpop.f32.mrf.mxu0
      %701 = vmatprep.mubr.bf16.mxu0 0
      %702 = vmatmul.mubr.bf16.gmra.mxu0 %v616
      %v703 = vpop.f32.mrf.mxu0
      %v704 = vadd.f32 %v471, %v703
      %v705 = vpop.f32.mrf.mxu0
      %v706 = vpop.f32.mrf.mxu0
      %v707 = vadd.f32 %v474, %v706
      %v708 = vpop.f32.mrf.mxu0
      %709 = vmatprep.mubr.bf16.mxu0 0
      %710 = vmatmul.mubr.bf16.gmra.mxu0 %v619
      %v711 = vpop.f32.mrf.mxu0
      %v712 = vadd.f32 %v479, %v711
      %v713 = vpop.f32.mrf.mxu0
      %v714 = vpop.f32.mrf.mxu0
      %v715 = vadd.f32 %v482, %v714
      %v716 = vpop.f32.mrf.mxu0
      %717 = vmatprep.mubr.bf16.mxu0 0
      %718 = vmatmul.mubr.bf16.gmra.mxu0 %v622
      %v719 = vpop.f32.mrf.mxu0
      %v720 = vadd.f32 %v487, %v719
      %v721 = vpop.f32.mrf.mxu0
      %v722 = vpop.f32.mrf.mxu0
      %v723 = vadd.f32 %v490, %v722
      %v724 = vpop.f32.mrf.mxu0
      %725 = vmatprep.mubr.bf16.mxu0 0
      %726 = vmatmul.mubr.bf16.gmra.mxu0 %v625
      %v727 = vpop.f32.mrf.mxu0
      %v728 = vadd.f32 %v495, %v727
      %v729 = vpop.f32.mrf.mxu0
      %v730 = vpop.f32.mrf.mxu0
      %v731 = vadd.f32 %v498, %v730
      %v732 = vpop.f32.mrf.mxu0
      %733 = vmatprep.mubr.bf16.mxu0 0
      %734 = vmatmul.mubr.bf16.gmra.mxu0 %v628
      %v735 = vpop.f32.mrf.mxu0
      %v736 = vadd.f32 %v503, %v735
      %v737 = vpop.f32.mrf.mxu0
      %v738 = vpop.f32.mrf.mxu0
      %v739 = vadd.f32 %v506, %v738
      %v740 = vpop.f32.mrf.mxu0
      %741 = vmatprep.mubr.bf16.mxu0 0
      %742 = vmatmul.mubr.bf16.gmra.mxu0 %v631
      %v743 = vpop.f32.mrf.mxu0
      %v744 = vadd.f32 %v511, %v743
      %v745 = vpop.f32.mrf.mxu0
      %v746 = vpop.f32.mrf.mxu0
      %v747 = vadd.f32 %v514, %v746
      %v748 = vpop.f32.mrf.mxu0
      %749 = vmatprep.mubr.bf16.mxu0 0
      %750 = vmatmul.mubr.bf16.gmra.mxu0 %v634
      %v751 = vpop.f32.mrf.mxu0
      %v752 = vadd.f32 %v519, %v751
      %v753 = vpop.f32.mrf.mxu0
      %v754 = vpop.f32.mrf.mxu0
      %v755 = vadd.f32 %v522, %v754
      %v756 = vpop.f32.mrf.mxu0
      %757 = vmatprep.mubr.bf16.mxu0 0
      %758 = vmatmul.mubr.bf16.gmra.mxu0 %v637
      %v759 = vpop.f32.mrf.mxu0
      %v760 = vadd.f32 %v527, %v759
      %v761 = vpop.f32.mrf.mxu0
      %v762 = vpop.f32.mrf.mxu0
      %v763 = vadd.f32 %v530, %v762
      %v764 = vpop.f32.mrf.mxu0
      %765 = vmatprep.mubr.bf16.mxu0 0
      %766 = vmatmul.mubr.bf16.gmra.mxu0 %v640
      %v767 = vpop.f32.mrf.mxu0
      %v768 = vadd.f32 %v535, %v767
      %v769 = vpop.f32.mrf.mxu0
      %v770 = vpop.f32.mrf.mxu0
      %v771 = vadd.f32 %v538, %v770
      %v772 = vpop.f32.mrf.mxu0
      %773 = vdwg.mxu0
      %s774 = sadd.s32 %s243, 48
      %s775 = sshra.s32 %s774, 3
      %s776 = sand.u32 %s774, 7
      %s777 = smul.addr %s775, 4
      %s778 = scalar_lea.vmem %s223, %s777
      %v779 = vld [vmem:[%s778] sm:$0xf]
      %v780 = vld [vmem:[%s778 + $0x4] sm:$0xf]
      %v781 = vld [vmem:[%s778 + $0x8] sm:$0xf]
      %v782 = vld [vmem:[%s778 + $0xc] sm:$0xf]
      %v783 = vld [vmem:[%s778 + $0x10] sm:$0xf]
      %v784 = vld [vmem:[%s778 + $0x14] sm:$0xf]
      %v785 = vld [vmem:[%s778 + $0x18] sm:$0xf]
      %v786 = vld [vmem:[%s778 + $0x1c] sm:$0xf]
      %v787 = vld [vmem:[%s778 + $0x20] sm:$0xf]
      %v788 = vld [vmem:[%s778 + $0x24] sm:$0xf]
      %v789 = vld [vmem:[%s778 + $0x28] sm:$0xf]
      %v790 = vld [vmem:[%s778 + $0x2c] sm:$0xf]
      %v791 = vld [vmem:[%s778 + $0x30] sm:$0xf]
      %v792 = vld [vmem:[%s778 + $0x34] sm:$0xf]
      %v793 = vld [vmem:[%s778 + $0x38] sm:$0xf]
      %v794 = vld [vmem:[%s778 + $0x3c] sm:$0xf]
      %v795 = vld [vmem:[%s778 + $0x40] sm:$0xf]
      %v796 = vld [vmem:[%s778 + $0x44] sm:$0xf]
      %v797 = vld [vmem:[%s778 + $0x48] sm:$0xf]
      %v798 = vld [vmem:[%s778 + $0x4c] sm:$0xf]
      %v799 = vld [vmem:[%s778 + $0x50] sm:$0xf]
      %v800 = vld [vmem:[%s778 + $0x54] sm:$0xf]
      %v801 = vld [vmem:[%s778 + $0x58] sm:$0xf]
      %v802 = vld [vmem:[%s778 + $0x5c] sm:$0xf]
      %s803 = scalar_lea.vmem %s1, 16
      %v804 = vld [vmem:[%s803] sm:$0xf]
      %v805 = vld [vmem:[%s803 + $0x4] sm:$0x3]
      %v830 = vunpack.c.l.b16 %v779
      %v831 = vunpack.c.l.b16 %v780
      %v832 = vunpack.c.l.b16 %v781
      %v833 = vunpack.c.l.b16 %v782
      %v834 = vunpack.c.l.b16 %v783
      %v835 = vunpack.c.l.b16 %v784
      %v836 = vunpack.c.l.b16 %v785
      %v837 = vunpack.c.l.b16 %v786
      %v838 = vunpack.c.l.b16 %v787
      %v839 = vunpack.c.l.b16 %v788
      %v840 = vunpack.c.l.b16 %v789
      %v841 = vunpack.c.l.b16 %v790
      %v842 = vunpack.c.l.b16 %v791
      %v843 = vunpack.c.l.b16 %v792
      %v844 = vunpack.c.l.b16 %v793
      %v845 = vunpack.c.l.b16 %v794
      %v846 = vunpack.c.l.b16 %v795
      %v847 = vunpack.c.l.b16 %v796
      %v848 = vunpack.c.l.b16 %v797
      %v849 = vunpack.c.l.b16 %v798
      %v850 = vunpack.c.l.b16 %v799
      %v851 = vunpack.c.l.b16 %v800
      %v852 = vunpack.c.l.b16 %v801
      %v853 = vunpack.c.l.b16 %v802
      %v854 = vpack.c.b16 %v831, %v830
      %v855 = vpack.c.b16 %v833, %v832
      %v856 = vpack.c.b16 %v835, %v834
      %v857 = vpack.c.b16 %v837, %v836
      %v858 = vpack.c.b16 %v839, %v838
      %v859 = vpack.c.b16 %v841, %v840
      %v860 = vpack.c.b16 %v843, %v842
      %v861 = vpack.c.b16 %v845, %v844
      %v862 = vpack.c.b16 %v847, %v846
      %v863 = vpack.c.b16 %v849, %v848
      %v864 = vpack.c.b16 %v851, %v850
      %v865 = vpack.c.b16 %v853, %v852
      %v868 = vunpack.c.l.b16 %v804
      %v869 = vunpack.c.l.b16 %v805
      %v870 = vpack.c.b16 %v869, %v868
      %v872 = vsel %vm371, %v854, 0
      %v875 = vsel %vm371, %v855, 0
      %v878 = vsel %vm371, %v856, 0
      %v881 = vsel %vm371, %v857, 0
      %v884 = vsel %vm371, %v858, 0
      %v887 = vsel %vm371, %v859, 0
      %v890 = vsel %vm371, %v860, 0
      %v893 = vsel %vm371, %v861, 0
      %v896 = vsel %vm371, %v862, 0
      %v899 = vsel %vm371, %v863, 0
      %v902 = vsel %vm371, %v864, 0
      %v905 = vsel %vm371, %v865, 0
      %v908 = vsel %vm408, %v870, 0
      %910 = vmatprep.subr.bf16.mxu0 0
      %911 = vmatpush1.bf16.msra.mxu0 0
      %912 = vmatprep.subr.bf16.mxu0 0
      %913 = vmatpush1.bf16.msra.mxu0 0
      %914 = vmatprep.subr.bf16.mxu0 0
      %915 = vmatpush1.bf16.msra.mxu0 0
      %916 = vmatprep.subr.bf16.mxu0 0
      %917 = vmatpush1.bf16.msra.mxu0 0
      %918 = vmatprep.subr.bf16.mxu0 0
      %919 = vmatpush1.bf16.msra.mxu0 0
      %920 = vmatprep.subr.bf16.mxu0 0
      %921 = vmatpush1.bf16.msra.mxu0 0
      %922 = vmatprep.subr.bf16.mxu0 0
      %923 = vmatpush1.bf16.msra.mxu0 0
      %924 = vmatprep.subr.bf16.mxu0 0
      %925 = vmatpush1.bf16.msra.mxu0 %v908
      %926 = vmatprep.subr.bf16.mxu0 0
      %927 = vmatpush2.bf16.msra.mxu0 0
      %928 = vmatprep.subr.bf16.mxu0 0
      %929 = vmatpush2.bf16.msra.mxu0 0
      %930 = vmatprep.subr.bf16.mxu0 0
      %931 = vmatpush2.bf16.msra.mxu0 0
      %932 = vmatprep.subr.bf16.mxu0 0
      %933 = vmatpush2.bf16.msra.mxu0 0
      %934 = vmatprep.subr.bf16.mxu0 0
      %935 = vmatpush2.bf16.msra.mxu0 0
      %936 = vmatprep.subr.bf16.mxu0 0
      %937 = vmatpush2.bf16.msra.mxu0 0
      %938 = vmatprep.subr.bf16.mxu0 0
      %939 = vmatpush2.bf16.msra.mxu0 0
      %940 = vmatprep.subr.bf16.mxu0 0
      %941 = vmatpush2.bf16.msra.mxu0 0
      %942 = vmatprep.mubr.bf16.mxu0 0
      %943 = vmatmul.mubr.bf16.gmra.mxu0 %v872
      %v944 = vpop.f32.mrf.mxu0
      %v945 = vadd.f32 0.0, %v944
      %v946 = vpop.f32.mrf.mxu0
      %v947 = vpop.f32.mrf.mxu0
      %v948 = vadd.f32 0.0, %v947
      %v949 = vpop.f32.mrf.mxu0
      %950 = vmatprep.mubr.bf16.mxu0 0
      %951 = vmatmul.mubr.bf16.gmra.mxu0 %v875
      %v952 = vpop.f32.mrf.mxu0
      %v953 = vadd.f32 0.0, %v952
      %v954 = vpop.f32.mrf.mxu0
      %v955 = vpop.f32.mrf.mxu0
      %v956 = vadd.f32 0.0, %v955
      %v957 = vpop.f32.mrf.mxu0
      %958 = vmatprep.mubr.bf16.mxu0 0
      %959 = vmatmul.mubr.bf16.gmra.mxu0 %v878
      %v960 = vpop.f32.mrf.mxu0
      %v961 = vadd.f32 0.0, %v960
      %v962 = vpop.f32.mrf.mxu0
      %v963 = vpop.f32.mrf.mxu0
      %v964 = vadd.f32 0.0, %v963
      %v965 = vpop.f32.mrf.mxu0
      %966 = vmatprep.mubr.bf16.mxu0 0
      %967 = vmatmul.mubr.bf16.gmra.mxu0 %v881
      %v968 = vpop.f32.mrf.mxu0
      %v969 = vadd.f32 0.0, %v968
      %v970 = vpop.f32.mrf.mxu0
      %v971 = vpop.f32.mrf.mxu0
      %v972 = vadd.f32 0.0, %v971
      %v973 = vpop.f32.mrf.mxu0
      %974 = vmatprep.mubr.bf16.mxu0 0
      %975 = vmatmul.mubr.bf16.gmra.mxu0 %v884
      %v976 = vpop.f32.mrf.mxu0
      %v977 = vadd.f32 0.0, %v976
      %v978 = vpop.f32.mrf.mxu0
      %v979 = vpop.f32.mrf.mxu0
      %v980 = vadd.f32 0.0, %v979
      %v981 = vpop.f32.mrf.mxu0
      %982 = vmatprep.mubr.bf16.mxu0 0
      %983 = vmatmul.mubr.bf16.gmra.mxu0 %v887
      %v984 = vpop.f32.mrf.mxu0
      %v985 = vadd.f32 0.0, %v984
      %v986 = vpop.f32.mrf.mxu0
      %v987 = vpop.f32.mrf.mxu0
      %v988 = vadd.f32 0.0, %v987
      %v989 = vpop.f32.mrf.mxu0
      %990 = vmatprep.mubr.bf16.mxu0 0
      %991 = vmatmul.mubr.bf16.gmra.mxu0 %v890
      %v992 = vpop.f32.mrf.mxu0
      %v993 = vadd.f32 0.0, %v992
      %v994 = vpop.f32.mrf.mxu0
      %v995 = vpop.f32.mrf.mxu0
      %v996 = vadd.f32 0.0, %v995
      %v997 = vpop.f32.mrf.mxu0
      %998 = vmatprep.mubr.bf16.mxu0 0
      %999 = vmatmul.mubr.bf16.gmra.mxu0 %v893
      %v1000 = vpop.f32.mrf.mxu0
      %v1001 = vadd.f32 0.0, %v1000
      %v1002 = vpop.f32.mrf.mxu0
      %v1003 = vpop.f32.mrf.mxu0
      %v1004 = vadd.f32 0.0, %v1003
      %v1005 = vpop.f32.mrf.mxu0
      %1006 = vmatprep.mubr.bf16.mxu0 0
      %1007 = vmatmul.mubr.bf16.gmra.mxu0 %v896
      %v1008 = vpop.f32.mrf.mxu0
      %v1009 = vadd.f32 0.0, %v1008
      %v1010 = vpop.f32.mrf.mxu0
      %v1011 = vpop.f32.mrf.mxu0
      %v1012 = vadd.f32 0.0, %v1011
      %v1013 = vpop.f32.mrf.mxu0
      %1014 = vmatprep.mubr.bf16.mxu0 0
      %1015 = vmatmul.mubr.bf16.gmra.mxu0 %v899
      %v1016 = vpop.f32.mrf.mxu0
      %v1017 = vadd.f32 0.0, %v1016
      %v1018 = vpop.f32.mrf.mxu0
      %v1019 = vpop.f32.mrf.mxu0
      %v1020 = vadd.f32 0.0, %v1019
      %v1021 = vpop.f32.mrf.mxu0
      %1022 = vmatprep.mubr.bf16.mxu0 0
      %1023 = vmatmul.mubr.bf16.gmra.mxu0 %v902
      %v1024 = vpop.f32.mrf.mxu0
      %v1025 = vadd.f32 0.0, %v1024
      %v1026 = vpop.f32.mrf.mxu0
      %v1027 = vpop.f32.mrf.mxu0
      %v1028 = vadd.f32 0.0, %v1027
      %v1029 = vpop.f32.mrf.mxu0
      %1030 = vmatprep.mubr.bf16.mxu0 0
      %1031 = vmatmul.mubr.bf16.gmra.mxu0 %v905
      %v1032 = vpop.f32.mrf.mxu0
      %v1033 = vadd.f32 0.0, %v1032
      %v1034 = vpop.f32.mrf.mxu0
      %v1035 = vpop.f32.mrf.mxu0
      %v1036 = vadd.f32 0.0, %v1035
      %v1037 = vpop.f32.mrf.mxu0
      %1038 = vdwg.mxu0
      %v1039 = vadd.f32 %v680, %v945
      %v1040 = vadd.f32 %v683, %v948
      %v1041 = vadd.f32 %v688, %v953
      %v1042 = vadd.f32 %v691, %v956
      %v1043 = vadd.f32 %v696, %v961
      %v1044 = vadd.f32 %v699, %v964
      %v1045 = vadd.f32 %v704, %v969
      %v1046 = vadd.f32 %v707, %v972
      %v1047 = vadd.f32 %v712, %v977
      %v1048 = vadd.f32 %v715, %v980
      %v1049 = vadd.f32 %v720, %v985
      %v1050 = vadd.f32 %v723, %v988
      %v1051 = vadd.f32 %v728, %v993
      %v1052 = vadd.f32 %v731, %v996
      %v1053 = vadd.f32 %v736, %v1001
      %v1054 = vadd.f32 %v739, %v1004
      %v1055 = vadd.f32 %v744, %v1009
      %v1056 = vadd.f32 %v747, %v1012
      %v1057 = vadd.f32 %v752, %v1017
      %v1058 = vadd.f32 %v755, %v1020
      %v1059 = vadd.f32 %v760, %v1025
      %v1060 = vadd.f32 %v763, %v1028
      %v1061 = vadd.f32 %v768, %v1033
      %v1062 = vadd.f32 %v771, %v1036
      %v1063 = vld [vmem:[%s2] sm:$0xff]
      %v1064 = vld [vmem:[%s2 + $0x8] sm:$0xff]
      %v1065 = vld [vmem:[%s2 + $0x10] sm:$0xff]
      %v1066 = vld [vmem:[%s2 + $0x18] sm:$0xff]
      %v1067 = vld [vmem:[%s2 + $0x20] sm:$0xff]
      %v1068 = vld [vmem:[%s2 + $0x28] sm:$0xff]
      %v1069 = vld [vmem:[%s2 + $0x30] sm:$0xff]
      %v1070 = vld [vmem:[%s2 + $0x38] sm:$0xff]
      %v1071 = vld [vmem:[%s2 + $0x40] sm:$0xff]
      %v1072 = vld [vmem:[%s2 + $0x48] sm:$0xff]
      %v1073 = vld [vmem:[%s2 + $0x50] sm:$0xff]
      %v1074 = vld [vmem:[%s2 + $0x58] sm:$0xff]
      %v1075 = vld [vmem:[%s2 + $0x60] sm:$0xff]
      %v1076 = vld [vmem:[%s2 + $0x68] sm:$0xff]
      %v1077 = vld [vmem:[%s2 + $0x70] sm:$0xff]
      %v1078 = vld [vmem:[%s2 + $0x78] sm:$0xff]
      %v1079 = vld [vmem:[%s2 + $0x80] sm:$0xff]
      %v1080 = vld [vmem:[%s2 + $0x88] sm:$0xff]
      %v1081 = vld [vmem:[%s2 + $0x90] sm:$0xff]
      %v1082 = vld [vmem:[%s2 + $0x98] sm:$0xff]
      %v1083 = vld [vmem:[%s2 + $0xa0] sm:$0xff]
      %v1084 = vld [vmem:[%s2 + $0xa8] sm:$0xff]
      %v1085 = vld [vmem:[%s2 + $0xb0] sm:$0xff]
      %v1086 = vld [vmem:[%s2 + $0xb8] sm:$0xff]
      %1088 = vset.pattern.permute.xlu0 0
      %1089 = vperm.xlu0 %1088, %v1063
      %v1090 = vpop.permute.xlu0 %1089
      %1093 = vset.pattern.permute.xlu0 0
      %1094 = vperm.xlu0 %1093, %v1064
      %v1095 = vpop.permute.xlu0 %1094
      %1098 = vset.pattern.permute.xlu0 0
      %1099 = vperm.xlu0 %1098, %v1065
      %v1100 = vpop.permute.xlu0 %1099
      %1103 = vset.pattern.permute.xlu0 0
      %1104 = vperm.xlu0 %1103, %v1066
      %v1105 = vpop.permute.xlu0 %1104
      %1108 = vset.pattern.permute.xlu0 0
      %1109 = vperm.xlu0 %1108, %v1067
      %v1110 = vpop.permute.xlu0 %1109
      %1113 = vset.pattern.permute.xlu0 0
      %1114 = vperm.xlu0 %1113, %v1068
      %v1115 = vpop.permute.xlu0 %1114
      %1118 = vset.pattern.permute.xlu0 0
      %1119 = vperm.xlu0 %1118, %v1069
      %v1120 = vpop.permute.xlu0 %1119
      %1123 = vset.pattern.permute.xlu0 0
      %1124 = vperm.xlu0 %1123, %v1070
      %v1125 = vpop.permute.xlu0 %1124
      %1128 = vset.pattern.permute.xlu0 0
      %1129 = vperm.xlu0 %1128, %v1071
      %v1130 = vpop.permute.xlu0 %1129
      %1133 = vset.pattern.permute.xlu0 0
      %1134 = vperm.xlu0 %1133, %v1072
      %v1135 = vpop.permute.xlu0 %1134
      %1138 = vset.pattern.permute.xlu0 0
      %1139 = vperm.xlu0 %1138, %v1073
      %v1140 = vpop.permute.xlu0 %1139
      %1143 = vset.pattern.permute.xlu0 0
      %1144 = vperm.xlu0 %1143, %v1074
      %v1145 = vpop.permute.xlu0 %1144
      %1148 = vset.pattern.permute.xlu0 0
      %1149 = vperm.xlu0 %1148, %v1075
      %v1150 = vpop.permute.xlu0 %1149
      %1153 = vset.pattern.permute.xlu0 0
      %1154 = vperm.xlu0 %1153, %v1076
      %v1155 = vpop.permute.xlu0 %1154
      %1158 = vset.pattern.permute.xlu0 0
      %1159 = vperm.xlu0 %1158, %v1077
      %v1160 = vpop.permute.xlu0 %1159
      %1163 = vset.pattern.permute.xlu0 0
      %1164 = vperm.xlu0 %1163, %v1078
      %v1165 = vpop.permute.xlu0 %1164
      %1168 = vset.pattern.permute.xlu0 0
      %1169 = vperm.xlu0 %1168, %v1079
      %v1170 = vpop.permute.xlu0 %1169
      %1173 = vset.pattern.permute.xlu0 0
      %1174 = vperm.xlu0 %1173, %v1080
      %v1175 = vpop.permute.xlu0 %1174
      %1178 = vset.pattern.permute.xlu0 0
      %1179 = vperm.xlu0 %1178, %v1081
      %v1180 = vpop.permute.xlu0 %1179
      %1183 = vset.pattern.permute.xlu0 0
      %1184 = vperm.xlu0 %1183, %v1082
      %v1185 = vpop.permute.xlu0 %1184
      %1188 = vset.pattern.permute.xlu0 0
      %1189 = vperm.xlu0 %1188, %v1083
      %v1190 = vpop.permute.xlu0 %1189
      %1193 = vset.pattern.permute.xlu0 0
      %1194 = vperm.xlu0 %1193, %v1084
      %v1195 = vpop.permute.xlu0 %1194
      %1198 = vset.pattern.permute.xlu0 0
      %1199 = vperm.xlu0 %1198, %v1085
      %v1200 = vpop.permute.xlu0 %1199
      %1203 = vset.pattern.permute.xlu0 0
      %1204 = vperm.xlu0 %1203, %v1086
      %v1205 = vpop.permute.xlu0 %1204
      %v1207 = vmul.f32 %v1039, %v1090
      %v1208 = vmul.f32 %v1040, %v1095
      %v1209 = vmul.f32 %v1041, %v1100
      %v1210 = vmul.f32 %v1042, %v1105
      %v1211 = vmul.f32 %v1043, %v1110
      %v1212 = vmul.f32 %v1044, %v1115
      %v1213 = vmul.f32 %v1045, %v1120
      %v1214 = vmul.f32 %v1046, %v1125
      %v1215 = vmul.f32 %v1047, %v1130
      %v1216 = vmul.f32 %v1048, %v1135
      %v1217 = vmul.f32 %v1049, %v1140
      %v1218 = vmul.f32 %v1050, %v1145
      %v1219 = vmul.f32 %v1051, %v1150
      %v1220 = vmul.f32 %v1052, %v1155
      %v1221 = vmul.f32 %v1053, %v1160
      %v1222 = vmul.f32 %v1054, %v1165
      %v1223 = vmul.f32 %v1055, %v1170
      %v1224 = vmul.f32 %v1056, %v1175
      %v1225 = vmul.f32 %v1057, %v1180
      %v1226 = vmul.f32 %v1058, %v1185
      %v1227 = vmul.f32 %v1059, %v1190
      %v1228 = vmul.f32 %v1060, %v1195
      %v1229 = vmul.f32 %v1061, %v1200
      %v1230 = vmul.f32 %v1062, %v1205
      %v1231 = vadd.f32 %v1207, %v1208
      %v1232 = vadd.f32 %v1231, %v1209
      %v1233 = vadd.f32 %v1232, %v1210
      %v1234 = vadd.f32 %v1233, %v1211
      %v1235 = vadd.f32 %v1234, %v1212
      %v1236 = vadd.f32 %v1235, %v1213
      %v1237 = vadd.f32 %v1236, %v1214
      %v1238 = vadd.f32 %v1237, %v1215
      %v1239 = vadd.f32 %v1238, %v1216
      %v1240 = vadd.f32 %v1239, %v1217
      %v1241 = vadd.f32 %v1240, %v1218
      %v1242 = vadd.f32 %v1241, %v1219
      %v1243 = vadd.f32 %v1242, %v1220
      %v1244 = vadd.f32 %v1243, %v1221
      %v1245 = vadd.f32 %v1244, %v1222
      %v1246 = vadd.f32 %v1245, %v1223
      %v1247 = vadd.f32 %v1246, %v1224
      %v1248 = vadd.f32 %v1247, %v1225
      %v1249 = vadd.f32 %v1248, %v1226
      %v1250 = vadd.f32 %v1249, %v1227
      %v1251 = vadd.f32 %v1250, %v1228
      %v1252 = vadd.f32 %v1251, %v1229
      %v1253 = vadd.f32 %v1252, %v1230
      %v1254 = vrot.slane %v1253, 4
      %v1255 = vadd.f32 %v1253, %v1254
      %v1256 = vrot.slane %v1255, 2
      %v1257 = vadd.f32 %v1255, %v1256
      %v1258 = vrot.slane %v1257, 1
      %v1259 = vadd.f32 %v1257, %v1258
      %1260 = vst [vmem:[%s241] sm:$0x1] %v1259
      %v1261 = vmul.f32 %v1207, %v1207
      %v1262 = vmul.f32 %v1208, %v1208
      %v1263 = vmul.f32 %v1209, %v1209
      %v1264 = vmul.f32 %v1210, %v1210
      %v1265 = vmul.f32 %v1211, %v1211
      %v1266 = vmul.f32 %v1212, %v1212
      %v1267 = vmul.f32 %v1213, %v1213
      %v1268 = vmul.f32 %v1214, %v1214
      %v1269 = vmul.f32 %v1215, %v1215
      %v1270 = vmul.f32 %v1216, %v1216
      %v1271 = vmul.f32 %v1217, %v1217
      %v1272 = vmul.f32 %v1218, %v1218
      %v1273 = vmul.f32 %v1219, %v1219
      %v1274 = vmul.f32 %v1220, %v1220
      %v1275 = vmul.f32 %v1221, %v1221
      %v1276 = vmul.f32 %v1222, %v1222
      %v1277 = vmul.f32 %v1223, %v1223
      %v1278 = vmul.f32 %v1224, %v1224
      %v1279 = vmul.f32 %v1225, %v1225
      %v1280 = vmul.f32 %v1226, %v1226
      %v1281 = vmul.f32 %v1227, %v1227
      %v1282 = vmul.f32 %v1228, %v1228
      %v1283 = vmul.f32 %v1229, %v1229
      %v1284 = vmul.f32 %v1230, %v1230
      %v1285 = vadd.f32 %v1261, %v1262
      %v1286 = vadd.f32 %v1285, %v1263
      %v1287 = vadd.f32 %v1286, %v1264
      %v1288 = vadd.f32 %v1287, %v1265
      %v1289 = vadd.f32 %v1288, %v1266
      %v1290 = vadd.f32 %v1289, %v1267
      %v1291 = vadd.f32 %v1290, %v1268
      %v1292 = vadd.f32 %v1291, %v1269
      %v1293 = vadd.f32 %v1292, %v1270
      %v1294 = vadd.f32 %v1293, %v1271
      %v1295 = vadd.f32 %v1294, %v1272
      %v1296 = vadd.f32 %v1295, %v1273
      %v1297 = vadd.f32 %v1296, %v1274
      %v1298 = vadd.f32 %v1297, %v1275
      %v1299 = vadd.f32 %v1298, %v1276
      %v1300 = vadd.f32 %v1299, %v1277
      %v1301 = vadd.f32 %v1300, %v1278
      %v1302 = vadd.f32 %v1301, %v1279
      %v1303 = vadd.f32 %v1302, %v1280
      %v1304 = vadd.f32 %v1303, %v1281
      %v1305 = vadd.f32 %v1304, %v1282
      %v1306 = vadd.f32 %v1305, %v1283
      %v1307 = vadd.f32 %v1306, %v1284
      %v1308 = vrot.slane %v1307, 4
      %v1309 = vadd.f32 %v1307, %v1308
      %v1310 = vrot.slane %v1309, 2
      %v1311 = vadd.f32 %v1309, %v1310
      %v1312 = vrot.slane %v1311, 1
      %v1313 = vadd.f32 %v1311, %v1312
      %1314 = vst [vmem:[%s241 + $0x1] sm:$0x1] %v1313
      %v1315 = vpack.c.bf16 %v1040, %v1039
      %v1316 = vpack.c.bf16 %v1042, %v1041
      %v1317 = vpack.c.bf16 %v1044, %v1043
      %v1318 = vpack.c.bf16 %v1046, %v1045
      %v1319 = vpack.c.bf16 %v1048, %v1047
      %v1320 = vpack.c.bf16 %v1050, %v1049
      %v1321 = vpack.c.bf16 %v1052, %v1051
      %v1322 = vpack.c.bf16 %v1054, %v1053
      %v1323 = vpack.c.bf16 %v1056, %v1055
      %v1324 = vpack.c.bf16 %v1058, %v1057
      %v1325 = vpack.c.bf16 %v1060, %v1059
      %v1326 = vpack.c.bf16 %v1062, %v1061
      %v1339 = vunpack.c.l.b16 %v1315
      %v1340 = vunpack.c.h.b16 %v1315
      %v1341 = vunpack.c.l.b16 %v1316
      %v1342 = vunpack.c.h.b16 %v1316
      %v1343 = vunpack.c.l.b16 %v1317
      %v1344 = vunpack.c.h.b16 %v1317
      %v1345 = vunpack.c.l.b16 %v1318
      %v1346 = vunpack.c.h.b16 %v1318
      %v1347 = vunpack.c.l.b16 %v1319
      %v1348 = vunpack.c.h.b16 %v1319
      %v1349 = vunpack.c.l.b16 %v1320
      %v1350 = vunpack.c.h.b16 %v1320
      %v1351 = vunpack.c.l.b16 %v1321
      %v1352 = vunpack.c.h.b16 %v1321
      %v1353 = vunpack.c.l.b16 %v1322
      %v1354 = vunpack.c.h.b16 %v1322
      %v1355 = vunpack.c.l.b16 %v1323
      %v1356 = vunpack.c.h.b16 %v1323
      %v1357 = vunpack.c.l.b16 %v1324
      %v1358 = vunpack.c.h.b16 %v1324
      %v1359 = vunpack.c.l.b16 %v1325
      %v1360 = vunpack.c.h.b16 %v1325
      %v1361 = vunpack.c.l.b16 %v1326
      %v1362 = vunpack.c.h.b16 %v1326
      %v1363 = vpack.c.b16 %v1339, %v1339
      %v1364 = vpack.c.b16 %v1340, %v1340
      %v1365 = vpack.c.b16 %v1341, %v1341
      %v1366 = vpack.c.b16 %v1342, %v1342
      %v1367 = vpack.c.b16 %v1343, %v1343
      %v1368 = vpack.c.b16 %v1344, %v1344
      %v1369 = vpack.c.b16 %v1345, %v1345
      %v1370 = vpack.c.b16 %v1346, %v1346
      %v1371 = vpack.c.b16 %v1347, %v1347
      %v1372 = vpack.c.b16 %v1348, %v1348
      %v1373 = vpack.c.b16 %v1349, %v1349
      %v1374 = vpack.c.b16 %v1350, %v1350
      %v1375 = vpack.c.b16 %v1351, %v1351
      %v1376 = vpack.c.b16 %v1352, %v1352
      %v1377 = vpack.c.b16 %v1353, %v1353
      %v1378 = vpack.c.b16 %v1354, %v1354
      %v1379 = vpack.c.b16 %v1355, %v1355
      %v1380 = vpack.c.b16 %v1356, %v1356
      %v1381 = vpack.c.b16 %v1357, %v1357
      %v1382 = vpack.c.b16 %v1358, %v1358
      %v1383 = vpack.c.b16 %v1359, %v1359
      %v1384 = vpack.c.b16 %v1360, %v1360
      %v1385 = vpack.c.b16 %v1361, %v1361
      %v1386 = vpack.c.b16 %v1362, %v1362
      %1411 = vst [vmem:[%s232] sm:$0xf] %v1363
      %1412 = vst [vmem:[%s232 + $0x4] sm:$0xf] %v1364
      %1413 = vst [vmem:[%s232 + $0x8] sm:$0xf] %v1365
      %1414 = vst [vmem:[%s232 + $0xc] sm:$0xf] %v1366
      %1415 = vst [vmem:[%s232 + $0x10] sm:$0xf] %v1367
      %1416 = vst [vmem:[%s232 + $0x14] sm:$0xf] %v1368
      %1417 = vst [vmem:[%s232 + $0x18] sm:$0xf] %v1369
      %1418 = vst [vmem:[%s232 + $0x1c] sm:$0xf] %v1370
      %1419 = vst [vmem:[%s232 + $0x20] sm:$0xf] %v1371
      %1420 = vst [vmem:[%s232 + $0x24] sm:$0xf] %v1372
      %1421 = vst [vmem:[%s232 + $0x28] sm:$0xf] %v1373
      %1422 = vst [vmem:[%s232 + $0x2c] sm:$0xf] %v1374
      %1423 = vst [vmem:[%s232 + $0x30] sm:$0xf] %v1375
      %1424 = vst [vmem:[%s232 + $0x34] sm:$0xf] %v1376
      %1425 = vst [vmem:[%s232 + $0x38] sm:$0xf] %v1377
      %1426 = vst [vmem:[%s232 + $0x3c] sm:$0xf] %v1378
      %1427 = vst [vmem:[%s232 + $0x40] sm:$0xf] %v1379
      %1428 = vst [vmem:[%s232 + $0x44] sm:$0xf] %v1380
      %1429 = vst [vmem:[%s232 + $0x48] sm:$0xf] %v1381
      %1430 = vst [vmem:[%s232 + $0x4c] sm:$0xf] %v1382
      %1431 = vst [vmem:[%s232 + $0x50] sm:$0xf] %v1383
      %1432 = vst [vmem:[%s232 + $0x54] sm:$0xf] %v1384
      %1433 = vst [vmem:[%s232 + $0x58] sm:$0xf] %v1385
      %1434 = vst [vmem:[%s232 + $0x5c] sm:$0xf] %v1386
      %s1435 = smul.u32 24, %s21
      %p1436 = scmp.lt.s32.totalorder %s20, 1
      %s1437 = scalar_select %p1436, %s20, 1
      %p1438 = scmp.lt.s32.totalorder %s1435, 47
      %s1439 = scalar_select %p1438, %s1435, 47
      %s1440 = smul.addr %s1437, 48
      %s1441 = sadd.s32 %s1439, %s1440
      %s1442 = smul.addr %s1441, 4
      %s1443 = scalar_lea.vmem %s3, %s1442
      %p1444 = scmp.lt.s32.totalorder %s20, 1
      %s1445 = scalar_select %p1444, %s20, 1
      %p1446 = scmp.lt.s32.totalorder %s21, 1
      %s1447 = scalar_select %p1446, %s21, 1
      %s1448 = smul.addr %s1445, 2
      %s1449 = sadd.s32 %s1447, %s1448
      %s1450 = smul.addr %s1449, 2
      %s1451 = scalar_lea.vmem %s4, %s1450
      // Predicated region
      $region33: #{conv_block_forward.1} parent=31 // pred_check
        %p1452 = pneg %p116
      $region34: #{conv_block_forward.1} parent=31 // pred_check_branch
        %1454 = sbr.rel (%p1452) target = $region36
      $region35: #{conv_block_forward.1} parent=31 // pred_region
        %s1455 = smul.u32 24, %s21
      $region36: #{conv_block_forward.1} parent=31 // pred_fallthru
        _
      // Predicated region
      $region37: #{conv_block_forward.1} parent=31 // pred_check
        %p1456 = pneg %p144
      $region38: #{conv_block_forward.1} parent=31 // pred_check_branch
        %1458 = sbr.rel (%p1456) target = $region40
      $region39: #{conv_block_forward.1} parent=31 // pred_region
        _
      $region40: #{conv_block_forward.1} parent=31 // pred_fallthru
        _
    $region32: #{conv_block_forward.1} parent=5 // pred_fallthru
      _
    %p1459 = scmp.le.s32.totalorder 2, %s11
    // Predicated region
    $region41: #{conv_block_forward.1} parent=5 // pred_check
      %p1460 = pneg %p1459
    $region42: #{conv_block_forward.1} parent=5 // pred_check_branch
      %1462 = sbr.rel (%p1460) target = $region44
    $region43: #{conv_block_forward.1} parent=5 // pred_region
      %s1463 = ssub.s32 %s11, 2
      // Predicated region
      $region45: #{conv_block_forward.1} parent=43 // pred_check
        %p1464 = pneg %p122
      $region46: #{conv_block_forward.1} parent=43 // pred_check_branch
        %1466 = sbr.rel (%p1464) target = $region48
      $region47: #{conv_block_forward.1} parent=43 // pred_region
        %s1467 = smul.u32 24, %s23
        %p1468 = scmp.lt.s32.totalorder %s22, 1
        %s1469 = scalar_select %p1468, %s22, 1
        %p1470 = scmp.lt.s32.totalorder %s1467, 47
        %s1471 = scalar_select %p1470, %s1467, 47
        %s1472 = smul.addr %s1469, 48
        %s1473 = sadd.s32 %s1471, %s1472
        %s1474 = smul.addr %s1473, 4
        %s1475 = scalar_lea.vmem %s3, %s1474
      $region48: #{conv_block_forward.1} parent=43 // pred_fallthru
        _
      // Predicated region
      $region49: #{conv_block_forward.1} parent=43 // pred_check
        %p1476 = pneg %p150
      $region50: #{conv_block_forward.1} parent=43 // pred_check_branch
        %1478 = sbr.rel (%p1476) target = $region52
      $region51: #{conv_block_forward.1} parent=43 // pred_region
        %p1479 = scmp.lt.s32.totalorder %s22, 1
        %s1480 = scalar_select %p1479, %s22, 1
        %p1481 = scmp.lt.s32.totalorder %s23, 1
        %s1482 = scalar_select %p1481, %s23, 1
        %s1483 = smul.addr %s1480, 2
        %s1484 = sadd.s32 %s1482, %s1483
        %s1485 = smul.addr %s1484, 2
        %s1486 = scalar_lea.vmem %s4, %s1485
      $region52: #{conv_block_forward.1} parent=43 // pred_fallthru
        _
    $region44: #{conv_block_forward.1} parent=5 // pred_fallthru
      _
  $region6: #{conv_block_forward.1} parent=0 // loop_footer
    %s15 = sadd.s32 1, %s11
  $region7: #{conv_block_forward.1} parent=0 // loop_footer_branch
    %10 = sbr.rel target = $region3
  $region8: #{conv_block_forward.1} parent=0 // loop_exit
    _

</llo_original>
